<compile_context>
chip_gen: v5e
topology: v5e:2x2
jax: 0.10.0
libtpu: 0.0.40
codegen_flags: <defaults>
</compile_context>

<pallas_src>
import functools

import jax
import jax.numpy as jnp
from jax.experimental import pallas as pl
from jax.experimental.pallas import tpu as pltpu


# ----------------------------- fused Pallas kernel ------------------------------

def _fused_tdnn_kernel(*refs, kwidths):
    n_tdnn = len(kwidths)
    it = iter(refs)
    x_ref, in_s_ref, in_t_ref = next(it), next(it), next(it)
    tdnn = [(next(it), next(it), next(it)) for _ in range(n_tdnn)]
    wa_ref, ba_ref = next(it), next(it)
    wmu_ref, wsig_ref, s_xv_ref, t_xv_ref = next(it), next(it), next(it), next(it)
    w_lin_ref, s_lin_ref, t_lin_ref = next(it), next(it), next(it)
    w_out_ref, s_out_ref, t_out_ref = next(it), next(it), next(it)
    o_ref = next(it)
    act_ref = next(it)                      # (Bb, T, C_scratch) f32 VMEM scratch

    Bb, T, d_in = x_ref.shape

    # ---- input BatchNorm1d (x.view(-1, D) -> BN -> view back): folded per-feature affine ----
    act_ref[:, :, :d_in] = x_ref[...] * in_s_ref[...] + in_t_ref[...]

    # ---- TDNN layers: valid conv over time as flattened 2-D bf16 MXU matmuls ----
    t_cur, c_cur = T, d_in
    y = None
    for li, ((w_ref, s_ref, t_ref), kw) in enumerate(zip(tdnn, kwidths)):
        c_out = w_ref.shape[-1]
        t_out = t_cur - (kw - 1)
        acc = jnp.zeros((Bb * t_out, c_out), jnp.float32)
        for k in range(kw):                 # small static unroll over context taps
            xk = act_ref[:, k:k + t_out, :c_cur].reshape(Bb * t_out, c_cur)
            acc = acc + jnp.dot(xk.astype(jnp.bfloat16), w_ref[k],
                                preferred_element_type=jnp.float32)
        y = jnp.maximum(acc.reshape(Bb, t_out, c_out) * s_ref[...] + t_ref[...], 0.0)
        if li + 1 < n_tdnn:                 # last TDNN layer feeds pooling directly (stay in vregs)
            act_ref[:, :t_out, :c_out] = y
        t_cur, c_cur = t_out, c_out

    # ---- attentive statistics pooling: softmax over time, weighted mean / std ----
    x = y                                                            # (Bb, T', C) f32
    e = jnp.sum(x * wa_ref[...], axis=-1, keepdims=True) + ba_ref[...]   # VPU mul + lane reduce
    e = e - jnp.max(e, axis=1, keepdims=True)
    p = jnp.exp(e)
    p = p * pl.reciprocal(jnp.sum(p, axis=1, keepdims=True), approx=False)
    mu = jnp.sum(p * x, axis=1)                                      # (Bb, C)
    d = x - mu.reshape(Bb, 1, c_cur)
    sig = jnp.sqrt(jnp.sum(p * (d * d), axis=1) + 1e-6)              # (Bb, C)

    # ---- x_vector: Linear on [mu, sig] without concat (split weight) + BN + ReLU ----
    h = (jnp.dot(mu.astype(jnp.bfloat16), wmu_ref[...], preferred_element_type=jnp.float32)
         + jnp.dot(sig.astype(jnp.bfloat16), wsig_ref[...], preferred_element_type=jnp.float32))
    h = jnp.maximum(h * s_xv_ref[...] + t_xv_ref[...], 0.0)

    # ---- linear: Linear + BN + ReLU (dropout = identity at inference) ----
    h = jnp.dot(h.astype(jnp.bfloat16), w_lin_ref[...], preferred_element_type=jnp.float32)
    h = jnp.maximum(h * s_lin_ref[...] + t_lin_ref[...], 0.0)

    # ---- output layer: Linear only ----
    h = jnp.dot(h.astype(jnp.bfloat16), w_out_ref[...], preferred_element_type=jnp.float32)
    h = h * s_out_ref[...] + t_out_ref[...]

    o_ref[...] = h.reshape(o_ref.shape)


# ------------------------------- parameters --------------------------------------

def _bn_fold(gamma, beta, mean, var, bias=None, eps=1e-5):
    s = gamma / jnp.sqrt(var + eps)
    b = bias if bias is not None else jnp.zeros_like(mean)
    t = (b - mean) * s + beta
    return s[None, :].astype(jnp.float32), t[None, :].astype(jnp.float32)


def init_params(key, input_dim, output_dim, node_num, kwidths):
    keys = iter(jax.random.split(key, 64))

    def nrm(shape, scale=0.1):
        return (scale * jax.random.normal(next(keys), shape)).astype(jnp.float32)

    def bn(c, bias=None):
        gamma = 1.0 + nrm((c,), 0.05)
        beta = nrm((c,), 0.05)
        mean = nrm((c,), 0.05)
        var = 1.0 + jnp.abs(nrm((c,), 0.05))
        return _bn_fold(gamma, beta, mean, var, bias)

    params = {'in_bn': bn(input_dim)}

    tdnn = []
    cin = input_dim
    for i, kw in enumerate(kwidths):
        cout = node_num[i]
        w = nrm((kw, cin, cout)).astype(jnp.bfloat16)      # bf16 MXU operands
        b = nrm((cout,), 0.05)
        s, t = bn(cout, bias=b)                            # conv bias folded into BN shift
        tdnn.append(dict(w=w, s=s, t=t))
        cin = cout
    params['tdnn'] = tdnn

    # attentive pooling: projection to a scalar logit per frame
    params['att'] = (nrm((1, node_num[4])), nrm((1, 1), 0.05))

    # x_vector: Linear(node_num[5] = 2*node_num[4], node_num[6]) + BN + ReLU (+dropout)
    c = node_num[4]
    w = nrm((node_num[5], node_num[6]))
    b = nrm((node_num[6],), 0.05)
    s, t = bn(node_num[6], bias=b)
    params['xvec'] = dict(wmu=w[:c].astype(jnp.bfloat16),
                          wsig=w[c:].astype(jnp.bfloat16), s=s, t=t)

    # linear: Linear(node_num[6], node_num[7]) + BN + ReLU (+dropout)
    w = nrm((node_num[6], node_num[7]))
    b = nrm((node_num[7],), 0.05)
    s, t = bn(node_num[7], bias=b)
    params['lin'] = dict(w=w.astype(jnp.bfloat16), s=s, t=t)

    # output_layer: Linear only
    w = nrm((node_num[7], output_dim))
    b = nrm((output_dim,), 0.05)
    params['out'] = dict(w=w.astype(jnp.bfloat16),
                         s=jnp.ones((1, output_dim), jnp.float32),
                         t=b[None, :])
    return params


# -------------------------------- forward ----------------------------------------

def _full_spec(a):
    nd = a.ndim
    return pl.BlockSpec(a.shape, lambda b, _nd=nd: (0,) * _nd)


def tdnn_forward(params, x, kwidths):
    B, T, d_in = x.shape
    total_ctx = sum(kw - 1 for kw in kwidths)
    if T <= total_ctx:
        raise ValueError(f"seq_len={T} too short for total TDNN context {total_ctx}")

    in_s, in_t = params['in_bn']
    args = [x, in_s, in_t]
    for lay in params['tdnn']:
        args += [lay['w'], lay['s'], lay['t']]
    wa, ba = params['att']
    args += [wa, ba]
    xv = params['xvec']
    args += [xv['wmu'], xv['wsig'], xv['s'], xv['t']]
    lin = params['lin']
    args += [lin['w'], lin['s'], lin['t']]
    out_l = params['out']
    args += [out_l['w'], out_l['s'], out_l['t']]

    out_dim = out_l['w'].shape[-1]
    c_scr = max([d_in] + [lay['w'].shape[-1] for lay in params['tdnn']])

    in_specs = [pl.BlockSpec((1, T, d_in), lambda b: (b, 0, 0))]
    in_specs += [_full_spec(a) for a in args[1:]]

    out = pl.pallas_call(
        functools.partial(_fused_tdnn_kernel, kwidths=tuple(kwidths)),
        out_shape=jax.ShapeDtypeStruct((B, 1, out_dim), jnp.float32),
        grid=(B,),
        in_specs=in_specs,
        out_specs=pl.BlockSpec((1, 1, out_dim), lambda b: (b, 0, 0)),
        scratch_shapes=[pltpu.VMEM((1, T, c_scr), jnp.float32)],
        compiler_params=pltpu.CompilerParams(dimension_semantics=("parallel",)),
    )(*args)
    return out.reshape(B, out_dim)


def reference_forward(params, x, kwidths):
    # Pure-JAX reference of the same math (bf16 matmul operands, f32 accumulation).
    in_s, in_t = params['in_bn']
    x = x * in_s + in_t
    for lay, kw in zip(params['tdnn'], kwidths):
        w, s, t = lay['w'], lay['s'], lay['t']
        B, T, cin = x.shape
        cout = w.shape[-1]
        tout = T - (kw - 1)
        acc = jnp.zeros((B * tout, cout), jnp.float32)
        for k in range(kw):
            xk = x[:, k:k + tout, :].reshape(B * tout, cin).astype(jnp.bfloat16)
            acc = acc + jnp.dot(xk, w[k], preferred_element_type=jnp.float32)
        x = jnp.maximum(acc.reshape(B, tout, cout) * s + t, 0.0)
    wa, ba = params['att']
    e = jnp.sum(x * wa, axis=-1, keepdims=True) + ba
    p = jax.nn.softmax(e, axis=1)
    mu = jnp.sum(p * x, axis=1)
    d = x - mu[:, None, :]
    sig = jnp.sqrt(jnp.sum(p * d * d, axis=1) + 1e-6)
    xv = params['xvec']
    h = (jnp.dot(mu.astype(jnp.bfloat16), xv['wmu'], preferred_element_type=jnp.float32)
         + jnp.dot(sig.astype(jnp.bfloat16), xv['wsig'], preferred_element_type=jnp.float32))
    h = jnp.maximum(h * xv['s'] + xv['t'], 0.0)
    lin = params['lin']
    h = jnp.dot(h.astype(jnp.bfloat16), lin['w'], preferred_element_type=jnp.float32)
    h = jnp.maximum(h * lin['s'] + lin['t'], 0.0)
    out_l = params['out']
    h = jnp.dot(h.astype(jnp.bfloat16), out_l['w'], preferred_element_type=jnp.float32)
    return h * out_l['s'] + out_l['t']


# ---------------------------------- main ------------------------------------------

if __name__ == "__main__":
    # Small configuration consistent with the module's constructor:
    #   input_dim=16, output_dim=8,
    #   node_num = [32, 32, 32, 32, 32, 64, 32, 32]  (node_num[5] = 2*node_num[4]),
    #   context  = [[-2,2], [-1,1], [-1,1], [0,0], [0,0]], full_context=True for all
    #   -> kernel widths [5, 3, 3, 1, 1]
    input_dim, output_dim = 16, 8
    node_num = [32, 32, 32, 32, 32, 64, 32, 32]
    kwidths = (5, 3, 3, 1, 1)
    batch, seq_len = 2, 16

    key = jax.random.PRNGKey(0)
    pkey, xkey = jax.random.split(key)
    params = init_params(pkey, input_dim, output_dim, node_num, kwidths)
    x = jax.random.normal(xkey, (batch, seq_len, input_dim), dtype=jnp.float32)

    fwd = jax.jit(functools.partial(tdnn_forward, kwidths=kwidths))
    out = jax.block_until_ready(fwd(params, x))

    ref = reference_forward(params, x, kwidths)
    assert out.shape == (batch, output_dim), out.shape
    assert jnp.allclose(out, ref, rtol=2e-3, atol=2e-3), (out, ref)

    print("KERNEL_OK")
</pallas_src>

<mosaic_0001>
module attributes {stable_mosaic.version = 11 : i64} {
  func.func @_fused_tdnn_kernel(%arg0: i32, %arg1: memref<1x16x16xf32, #tpu.memory_space<vmem>>, %arg2: memref<1x16xf32, #tpu.memory_space<vmem>>, %arg3: memref<1x16xf32, #tpu.memory_space<vmem>>, %arg4: memref<5x16x32xbf16, #tpu.memory_space<vmem>>, %arg5: memref<1x32xf32, #tpu.memory_space<vmem>>, %arg6: memref<1x32xf32, #tpu.memory_space<vmem>>, %arg7: memref<3x32x32xbf16, #tpu.memory_space<vmem>>, %arg8: memref<1x32xf32, #tpu.memory_space<vmem>>, %arg9: memref<1x32xf32, #tpu.memory_space<vmem>>, %arg10: memref<3x32x32xbf16, #tpu.memory_space<vmem>>, %arg11: memref<1x32xf32, #tpu.memory_space<vmem>>, %arg12: memref<1x32xf32, #tpu.memory_space<vmem>>, %arg13: memref<1x32x32xbf16, #tpu.memory_space<vmem>>, %arg14: memref<1x32xf32, #tpu.memory_space<vmem>>, %arg15: memref<1x32xf32, #tpu.memory_space<vmem>>, %arg16: memref<1x32x32xbf16, #tpu.memory_space<vmem>>, %arg17: memref<1x32xf32, #tpu.memory_space<vmem>>, %arg18: memref<1x32xf32, #tpu.memory_space<vmem>>, %arg19: memref<1x32xf32, #tpu.memory_space<vmem>>, %arg20: memref<1x1xf32, #tpu.memory_space<vmem>>, %arg21: memref<32x32xbf16, #tpu.memory_space<vmem>>, %arg22: memref<32x32xbf16, #tpu.memory_space<vmem>>, %arg23: memref<1x32xf32, #tpu.memory_space<vmem>>, %arg24: memref<1x32xf32, #tpu.memory_space<vmem>>, %arg25: memref<32x32xbf16, #tpu.memory_space<vmem>>, %arg26: memref<1x32xf32, #tpu.memory_space<vmem>>, %arg27: memref<1x32xf32, #tpu.memory_space<vmem>>, %arg28: memref<32x8xbf16, #tpu.memory_space<vmem>>, %arg29: memref<1x8xf32, #tpu.memory_space<vmem>>, %arg30: memref<1x8xf32, #tpu.memory_space<vmem>>, %arg31: memref<1x1x8xf32, #tpu.memory_space<vmem>>, %arg32: memref<1x16x32xf32, #tpu.memory_space<vmem>>) attributes {dimension_semantics = [#tpu.dimension_semantics<parallel>], iteration_bounds = array<i64: 2>, scalar_prefetch = 0 : i64, scratch_operands = 1 : i64, tpu.core_type = #tpu.core_type<tc>, window_params = [{transform_indices = @transform_0, window_bounds = array<i64: 1, 16, 16>}, {pipeline_mode = #tpu.pipeline_mode<synchronous>, transform_indices = @transform_1, window_bounds = array<i64: 1, 16>}, {pipeline_mode = #tpu.pipeline_mode<synchronous>, transform_indices = @transform_2, window_bounds = array<i64: 1, 16>}, {pipeline_mode = #tpu.pipeline_mode<synchronous>, transform_indices = @transform_3, window_bounds = array<i64: 5, 16, 32>}, {pipeline_mode = #tpu.pipeline_mode<synchronous>, transform_indices = @transform_4, window_bounds = array<i64: 1, 32>}, {pipeline_mode = #tpu.pipeline_mode<synchronous>, transform_indices = @transform_5, window_bounds = array<i64: 1, 32>}, {pipeline_mode = #tpu.pipeline_mode<synchronous>, transform_indices = @transform_6, window_bounds = array<i64: 3, 32, 32>}, {pipeline_mode = #tpu.pipeline_mode<synchronous>, transform_indices = @transform_7, window_bounds = array<i64: 1, 32>}, {pipeline_mode = #tpu.pipeline_mode<synchronous>, transform_indices = @transform_8, window_bounds = array<i64: 1, 32>}, {pipeline_mode = #tpu.pipeline_mode<synchronous>, transform_indices = @transform_9, window_bounds = array<i64: 3, 32, 32>}, {pipeline_mode = #tpu.pipeline_mode<synchronous>, transform_indices = @transform_10, window_bounds = array<i64: 1, 32>}, {pipeline_mode = #tpu.pipeline_mode<synchronous>, transform_indices = @transform_11, window_bounds = array<i64: 1, 32>}, {pipeline_mode = #tpu.pipeline_mode<synchronous>, transform_indices = @transform_12, window_bounds = array<i64: 1, 32, 32>}, {pipeline_mode = #tpu.pipeline_mode<synchronous>, transform_indices = @transform_13, window_bounds = array<i64: 1, 32>}, {pipeline_mode = #tpu.pipeline_mode<synchronous>, transform_indices = @transform_14, window_bounds = array<i64: 1, 32>}, {pipeline_mode = #tpu.pipeline_mode<synchronous>, transform_indices = @transform_15, window_bounds = array<i64: 1, 32, 32>}, {pipeline_mode = #tpu.pipeline_mode<synchronous>, transform_indices = @transform_16, window_bounds = array<i64: 1, 32>}, {pipeline_mode = #tpu.pipeline_mode<synchronous>, transform_indices = @transform_17, window_bounds = array<i64: 1, 32>}, {pipeline_mode = #tpu.pipeline_mode<synchronous>, transform_indices = @transform_18, window_bounds = array<i64: 1, 32>}, {pipeline_mode = #tpu.pipeline_mode<synchronous>, transform_indices = @transform_19, window_bounds = array<i64: 1, 1>}, {pipeline_mode = #tpu.pipeline_mode<synchronous>, transform_indices = @transform_20, window_bounds = array<i64: 32, 32>}, {pipeline_mode = #tpu.pipeline_mode<synchronous>, transform_indices = @transform_21, window_bounds = array<i64: 32, 32>}, {pipeline_mode = #tpu.pipeline_mode<synchronous>, transform_indices = @transform_22, window_bounds = array<i64: 1, 32>}, {pipeline_mode = #tpu.pipeline_mode<synchronous>, transform_indices = @transform_23, window_bounds = array<i64: 1, 32>}, {pipeline_mode = #tpu.pipeline_mode<synchronous>, transform_indices = @transform_24, window_bounds = array<i64: 32, 32>}, {pipeline_mode = #tpu.pipeline_mode<synchronous>, transform_indices = @transform_25, window_bounds = array<i64: 1, 32>}, {pipeline_mode = #tpu.pipeline_mode<synchronous>, transform_indices = @transform_26, window_bounds = array<i64: 1, 32>}, {pipeline_mode = #tpu.pipeline_mode<synchronous>, transform_indices = @transform_27, window_bounds = array<i64: 32, 8>}, {pipeline_mode = #tpu.pipeline_mode<synchronous>, transform_indices = @transform_28, window_bounds = array<i64: 1, 8>}, {pipeline_mode = #tpu.pipeline_mode<synchronous>, transform_indices = @transform_29, window_bounds = array<i64: 1, 8>}, {transform_indices = @transform_30, window_bounds = array<i64: 1, 1, 8>}]} {
    %c0 = arith.constant 0 : index
    %c0_0 = arith.constant 0 : index
    %c0_1 = arith.constant 0 : index
    %0 = vector.load %arg1[%c0, %c0_0, %c0_1] : memref<1x16x16xf32, #tpu.memory_space<vmem>>, vector<1x16x16xf32>
    %c0_2 = arith.constant 0 : index
    %c0_3 = arith.constant 0 : index
    %1 = vector.load %arg2[%c0_2, %c0_3] : memref<1x16xf32, #tpu.memory_space<vmem>>, vector<1x16xf32>
    %2 = vector.shape_cast %1 : vector<1x16xf32> to vector<1x1x16xf32>
    %3 = vector.broadcast %2 : vector<1x1x16xf32> to vector<1x16x16xf32>
    %4 = arith.mulf %0, %3 : vector<1x16x16xf32>
    %c0_4 = arith.constant 0 : index
    %c0_5 = arith.constant 0 : index
    %5 = vector.load %arg3[%c0_4, %c0_5] : memref<1x16xf32, #tpu.memory_space<vmem>>, vector<1x16xf32>
    %6 = vector.shape_cast %5 : vector<1x16xf32> to vector<1x1x16xf32>
    %7 = vector.broadcast %6 : vector<1x1x16xf32> to vector<1x16x16xf32>
    %8 = arith.addf %4, %7 : vector<1x16x16xf32>
    %c0_6 = arith.constant 0 : index
    %c0_7 = arith.constant 0 : index
    %c0_8 = arith.constant 0 : index
    %9 = vector.load %arg32[%c0_6, %c0_7, %c0_8] : memref<1x16x32xf32, #tpu.memory_space<vmem>>, vector<1x16x16xf32>
    tpu.vector_store %arg32[%c0_6, %c0_7, %c0_8], %8 {strides = array<i32>} : memref<1x16x32xf32, #tpu.memory_space<vmem>>, vector<1x16x16xf32>,
    %cst = arith.constant 0.000000e+00 : f32
    %10 = vector.broadcast %cst : f32 to vector<12x32xf32>
    %c0_9 = arith.constant 0 : index
    %c0_10 = arith.constant 0 : index
    %c0_11 = arith.constant 0 : index
    %11 = vector.load %arg32[%c0_9, %c0_10, %c0_11] : memref<1x16x32xf32, #tpu.memory_space<vmem>>, vector<1x12x16xf32>
    %12 = vector.shape_cast %11 : vector<1x12x16xf32> to vector<12x16xf32>
    %13 = arith.truncf %12 : vector<12x16xf32> to vector<12x16xbf16>
    %c0_12 = arith.constant 0 : index
    %c0_13 = arith.constant 0 : index
    %c0_14 = arith.constant 0 : index
    %14 = vector.load %arg4[%c0_12, %c0_13, %c0_14] : memref<5x16x32xbf16, #tpu.memory_space<vmem>>, vector<1x16x32xbf16>
    %15 = vector.shape_cast %14 : vector<1x16x32xbf16> to vector<16x32xbf16>
    %cst_15 = arith.constant dense<0.000000e+00> : vector<12x32xf32>
    %16 = tpu.matmul %13, %15, %cst_15 {dimension_numbers = #tpu.dot_dimension_numbers<[1], [0], [0], [1], [0, 0, 1, 1], [], []>} : vector<12x16xbf16>, vector<16x32xbf16>, vector<12x32xf32> -> vector<12x32xf32>
    %17 = arith.addf %10, %16 : vector<12x32xf32>
    %c0_16 = arith.constant 0 : index
    %c1 = arith.constant 1 : index
    %c0_17 = arith.constant 0 : index
    %18 = vector.load %arg32[%c0_16, %c1, %c0_17] : memref<1x16x32xf32, #tpu.memory_space<vmem>>, vector<1x12x16xf32>
    %19 = vector.shape_cast %18 : vector<1x12x16xf32> to vector<12x16xf32>
    %20 = arith.truncf %19 : vector<12x16xf32> to vector<12x16xbf16>
    %c1_18 = arith.constant 1 : index
    %c0_19 = arith.constant 0 : index
    %c0_20 = arith.constant 0 : index
    %21 = vector.load %arg4[%c1_18, %c0_19, %c0_20] : memref<5x16x32xbf16, #tpu.memory_space<vmem>>, vector<1x16x32xbf16>
    %22 = vector.shape_cast %21 : vector<1x16x32xbf16> to vector<16x32xbf16>
    %cst_21 = arith.constant dense<0.000000e+00> : vector<12x32xf32>
    %23 = tpu.matmul %20, %22, %cst_21 {dimension_numbers = #tpu.dot_dimension_numbers<[1], [0], [0], [1], [0, 0, 1, 1], [], []>} : vector<12x16xbf16>, vector<16x32xbf16>, vector<12x32xf32> -> vector<12x32xf32>
    %24 = arith.addf %17, %23 : vector<12x32xf32>
    %c0_22 = arith.constant 0 : index
    %c2 = arith.constant 2 : index
    %c0_23 = arith.constant 0 : index
    %25 = vector.load %arg32[%c0_22, %c2, %c0_23] : memref<1x16x32xf32, #tpu.memory_space<vmem>>, vector<1x12x16xf32>
    %26 = vector.shape_cast %25 : vector<1x12x16xf32> to vector<12x16xf32>
    %27 = arith.truncf %26 : vector<12x16xf32> to vector<12x16xbf16>
    %c2_24 = arith.constant 2 : index
    %c0_25 = arith.constant 0 : index
    %c0_26 = arith.constant 0 : index
    %28 = vector.load %arg4[%c2_24, %c0_25, %c0_26] : memref<5x16x32xbf16, #tpu.memory_space<vmem>>, vector<1x16x32xbf16>
    %29 = vector.shape_cast %28 : vector<1x16x32xbf16> to vector<16x32xbf16>
    %cst_27 = arith.constant dense<0.000000e+00> : vector<12x32xf32>
    %30 = tpu.matmul %27, %29, %cst_27 {dimension_numbers = #tpu.dot_dimension_numbers<[1], [0], [0], [1], [0, 0, 1, 1], [], []>} : vector<12x16xbf16>, vector<16x32xbf16>, vector<12x32xf32> -> vector<12x32xf32>
    %31 = arith.addf %24, %30 : vector<12x32xf32>
    %c0_28 = arith.constant 0 : index
    %c3 = arith.constant 3 : index
    %c0_29 = arith.constant 0 : index
    %32 = vector.load %arg32[%c0_28, %c3, %c0_29] : memref<1x16x32xf32, #tpu.memory_space<vmem>>, vector<1x12x16xf32>
    %33 = vector.shape_cast %32 : vector<1x12x16xf32> to vector<12x16xf32>
    %34 = arith.truncf %33 : vector<12x16xf32> to vector<12x16xbf16>
    %c3_30 = arith.constant 3 : index
    %c0_31 = arith.constant 0 : index
    %c0_32 = arith.constant 0 : index
    %35 = vector.load %arg4[%c3_30, %c0_31, %c0_32] : memref<5x16x32xbf16, #tpu.memory_space<vmem>>, vector<1x16x32xbf16>
    %36 = vector.shape_cast %35 : vector<1x16x32xbf16> to vector<16x32xbf16>
    %cst_33 = arith.constant dense<0.000000e+00> : vector<12x32xf32>
    %37 = tpu.matmul %34, %36, %cst_33 {dimension_numbers = #tpu.dot_dimension_numbers<[1], [0], [0], [1], [0, 0, 1, 1], [], []>} : vector<12x16xbf16>, vector<16x32xbf16>, vector<12x32xf32> -> vector<12x32xf32>
    %38 = arith.addf %31, %37 : vector<12x32xf32>
    %c0_34 = arith.constant 0 : index
    %c4 = arith.constant 4 : index
    %c0_35 = arith.constant 0 : index
    %39 = vector.load %arg32[%c0_34, %c4, %c0_35] : memref<1x16x32xf32, #tpu.memory_space<vmem>>, vector<1x12x16xf32>
    %40 = vector.shape_cast %39 : vector<1x12x16xf32> to vector<12x16xf32>
    %41 = arith.truncf %40 : vector<12x16xf32> to vector<12x16xbf16>
    %c4_36 = arith.constant 4 : index
    %c0_37 = arith.constant 0 : index
    %c0_38 = arith.constant 0 : index
    %42 = vector.load %arg4[%c4_36, %c0_37, %c0_38] : memref<5x16x32xbf16, #tpu.memory_space<vmem>>, vector<1x16x32xbf16>
    %43 = vector.shape_cast %42 : vector<1x16x32xbf16> to vector<16x32xbf16>
    %cst_39 = arith.constant dense<0.000000e+00> : vector<12x32xf32>
    %44 = tpu.matmul %41, %43, %cst_39 {dimension_numbers = #tpu.dot_dimension_numbers<[1], [0], [0], [1], [0, 0, 1, 1], [], []>} : vector<12x16xbf16>, vector<16x32xbf16>, vector<12x32xf32> -> vector<12x32xf32>
    %45 = arith.addf %38, %44 : vector<12x32xf32>
    %46 = vector.shape_cast %45 : vector<12x32xf32> to vector<1x12x32xf32>
    %c0_40 = arith.constant 0 : index
    %c0_41 = arith.constant 0 : index
    %47 = vector.load %arg5[%c0_40, %c0_41] : memref<1x32xf32, #tpu.memory_space<vmem>>, vector<1x32xf32>
    %48 = vector.shape_cast %47 : vector<1x32xf32> to vector<1x1x32xf32>
    %49 = vector.broadcast %48 : vector<1x1x32xf32> to vector<1x12x32xf32>
    %50 = arith.mulf %46, %49 : vector<1x12x32xf32>
    %c0_42 = arith.constant 0 : index
    %c0_43 = arith.constant 0 : index
    %51 = vector.load %arg6[%c0_42, %c0_43] : memref<1x32xf32, #tpu.memory_space<vmem>>, vector<1x32xf32>
    %52 = vector.shape_cast %51 : vector<1x32xf32> to vector<1x1x32xf32>
    %53 = vector.broadcast %52 : vector<1x1x32xf32> to vector<1x12x32xf32>
    %54 = arith.addf %50, %53 : vector<1x12x32xf32>
    %cst_44 = arith.constant 0.000000e+00 : f32
    %55 = vector.broadcast %cst_44 : f32 to vector<1x12x32xf32>
    %56 = arith.maximumf %54, %55 : vector<1x12x32xf32>
    %c0_45 = arith.constant 0 : index
    %c0_46 = arith.constant 0 : index
    %c0_47 = arith.constant 0 : index
    %57 = vector.load %arg32[%c0_45, %c0_46, %c0_47] : memref<1x16x32xf32, #tpu.memory_space<vmem>>, vector<1x12x32xf32>
    tpu.vector_store %arg32[%c0_45, %c0_46, %c0_47], %56 {strides = array<i32>} : memref<1x16x32xf32, #tpu.memory_space<vmem>>, vector<1x12x32xf32>,
    %cst_48 = arith.constant 0.000000e+00 : f32
    %58 = vector.broadcast %cst_48 : f32 to vector<10x32xf32>
    %c0_49 = arith.constant 0 : index
    %c0_50 = arith.constant 0 : index
    %c0_51 = arith.constant 0 : index
    %59 = vector.load %arg32[%c0_49, %c0_50, %c0_51] : memref<1x16x32xf32, #tpu.memory_space<vmem>>, vector<1x10x32xf32>
    %60 = vector.shape_cast %59 : vector<1x10x32xf32> to vector<10x32xf32>
    %61 = arith.truncf %60 : vector<10x32xf32> to vector<10x32xbf16>
    %c0_52 = arith.constant 0 : index
    %c0_53 = arith.constant 0 : index
    %c0_54 = arith.constant 0 : index
    %62 = vector.load %arg7[%c0_52, %c0_53, %c0_54] : memref<3x32x32xbf16, #tpu.memory_space<vmem>>, vector<1x32x32xbf16>
    %63 = vector.shape_cast %62 : vector<1x32x32xbf16> to vector<32x32xbf16>
    %cst_55 = arith.constant dense<0.000000e+00> : vector<10x32xf32>
    %64 = tpu.matmul %61, %63, %cst_55 {dimension_numbers = #tpu.dot_dimension_numbers<[1], [0], [0], [1], [0, 0, 1, 1], [], []>} : vector<10x32xbf16>, vector<32x32xbf16>, vector<10x32xf32> -> vector<10x32xf32>
    %65 = arith.addf %58, %64 : vector<10x32xf32>
    %c0_56 = arith.constant 0 : index
    %c1_57 = arith.constant 1 : index
    %c0_58 = arith.constant 0 : index
    %66 = vector.load %arg32[%c0_56, %c1_57, %c0_58] : memref<1x16x32xf32, #tpu.memory_space<vmem>>, vector<1x10x32xf32>
    %67 = vector.shape_cast %66 : vector<1x10x32xf32> to vector<10x32xf32>
    %68 = arith.truncf %67 : vector<10x32xf32> to vector<10x32xbf16>
    %c1_59 = arith.constant 1 : index
    %c0_60 = arith.constant 0 : index
    %c0_61 = arith.constant 0 : index
    %69 = vector.load %arg7[%c1_59, %c0_60, %c0_61] : memref<3x32x32xbf16, #tpu.memory_space<vmem>>, vector<1x32x32xbf16>
    %70 = vector.shape_cast %69 : vector<1x32x32xbf16> to vector<32x32xbf16>
    %cst_62 = arith.constant dense<0.000000e+00> : vector<10x32xf32>
    %71 = tpu.matmul %68, %70, %cst_62 {dimension_numbers = #tpu.dot_dimension_numbers<[1], [0], [0], [1], [0, 0, 1, 1], [], []>} : vector<10x32xbf16>, vector<32x32xbf16>, vector<10x32xf32> -> vector<10x32xf32>
    %72 = arith.addf %65, %71 : vector<10x32xf32>
    %c0_63 = arith.constant 0 : index
    %c2_64 = arith.constant 2 : index
    %c0_65 = arith.constant 0 : index
    %73 = vector.load %arg32[%c0_63, %c2_64, %c0_65] : memref<1x16x32xf32, #tpu.memory_space<vmem>>, vector<1x10x32xf32>
    %74 = vector.shape_cast %73 : vector<1x10x32xf32> to vector<10x32xf32>
    %75 = arith.truncf %74 : vector<10x32xf32> to vector<10x32xbf16>
    %c2_66 = arith.constant 2 : index
    %c0_67 = arith.constant 0 : index
    %c0_68 = arith.constant 0 : index
    %76 = vector.load %arg7[%c2_66, %c0_67, %c0_68] : memref<3x32x32xbf16, #tpu.memory_space<vmem>>, vector<1x32x32xbf16>
    %77 = vector.shape_cast %76 : vector<1x32x32xbf16> to vector<32x32xbf16>
    %cst_69 = arith.constant dense<0.000000e+00> : vector<10x32xf32>
    %78 = tpu.matmul %75, %77, %cst_69 {dimension_numbers = #tpu.dot_dimension_numbers<[1], [0], [0], [1], [0, 0, 1, 1], [], []>} : vector<10x32xbf16>, vector<32x32xbf16>, vector<10x32xf32> -> vector<10x32xf32>
    %79 = arith.addf %72, %78 : vector<10x32xf32>
    %80 = vector.shape_cast %79 : vector<10x32xf32> to vector<1x10x32xf32>
    %c0_70 = arith.constant 0 : index
    %c0_71 = arith.constant 0 : index
    %81 = vector.load %arg8[%c0_70, %c0_71] : memref<1x32xf32, #tpu.memory_space<vmem>>, vector<1x32xf32>
    %82 = vector.shape_cast %81 : vector<1x32xf32> to vector<1x1x32xf32>
    %83 = vector.broadcast %82 : vector<1x1x32xf32> to vector<1x10x32xf32>
    %84 = arith.mulf %80, %83 : vector<1x10x32xf32>
    %c0_72 = arith.constant 0 : index
    %c0_73 = arith.constant 0 : index
    %85 = vector.load %arg9[%c0_72, %c0_73] : memref<1x32xf32, #tpu.memory_space<vmem>>, vector<1x32xf32>
    %86 = vector.shape_cast %85 : vector<1x32xf32> to vector<1x1x32xf32>
    %87 = vector.broadcast %86 : vector<1x1x32xf32> to vector<1x10x32xf32>
    %88 = arith.addf %84, %87 : vector<1x10x32xf32>
    %cst_74 = arith.constant 0.000000e+00 : f32
    %89 = vector.broadcast %cst_74 : f32 to vector<1x10x32xf32>
    %90 = arith.maximumf %88, %89 : vector<1x10x32xf32>
    %c0_75 = arith.constant 0 : index
    %c0_76 = arith.constant 0 : index
    %c0_77 = arith.constant 0 : index
    %91 = vector.load %arg32[%c0_75, %c0_76, %c0_77] : memref<1x16x32xf32, #tpu.memory_space<vmem>>, vector<1x10x32xf32>
    tpu.vector_store %arg32[%c0_75, %c0_76, %c0_77], %90 {strides = array<i32>} : memref<1x16x32xf32, #tpu.memory_space<vmem>>, vector<1x10x32xf32>,
    %cst_78 = arith.constant 0.000000e+00 : f32
    %92 = vector.broadcast %cst_78 : f32 to vector<8x32xf32>
    %c0_79 = arith.constant 0 : index
    %c0_80 = arith.constant 0 : index
    %c0_81 = arith.constant 0 : index
    %93 = vector.load %arg32[%c0_79, %c0_80, %c0_81] : memref<1x16x32xf32, #tpu.memory_space<vmem>>, vector<1x8x32xf32>
    %94 = vector.shape_cast %93 : vector<1x8x32xf32> to vector<8x32xf32>
    %95 = arith.truncf %94 : vector<8x32xf32> to vector<8x32xbf16>
    %c0_82 = arith.constant 0 : index
    %c0_83 = arith.constant 0 : index
    %c0_84 = arith.constant 0 : index
    %96 = vector.load %arg10[%c0_82, %c0_83, %c0_84] : memref<3x32x32xbf16, #tpu.memory_space<vmem>>, vector<1x32x32xbf16>
    %97 = vector.shape_cast %96 : vector<1x32x32xbf16> to vector<32x32xbf16>
    %cst_85 = arith.constant dense<0.000000e+00> : vector<8x32xf32>
    %98 = tpu.matmul %95, %97, %cst_85 {dimension_numbers = #tpu.dot_dimension_numbers<[1], [0], [0], [1], [0, 0, 1, 1], [], []>} : vector<8x32xbf16>, vector<32x32xbf16>, vector<8x32xf32> -> vector<8x32xf32>
    %99 = arith.addf %92, %98 : vector<8x32xf32>
    %c0_86 = arith.constant 0 : index
    %c1_87 = arith.constant 1 : index
    %c0_88 = arith.constant 0 : index
    %100 = vector.load %arg32[%c0_86, %c1_87, %c0_88] : memref<1x16x32xf32, #tpu.memory_space<vmem>>, vector<1x8x32xf32>
    %101 = vector.shape_cast %100 : vector<1x8x32xf32> to vector<8x32xf32>
    %102 = arith.truncf %101 : vector<8x32xf32> to vector<8x32xbf16>
    %c1_89 = arith.constant 1 : index
    %c0_90 = arith.constant 0 : index
    %c0_91 = arith.constant 0 : index
    %103 = vector.load %arg10[%c1_89, %c0_90, %c0_91] : memref<3x32x32xbf16, #tpu.memory_space<vmem>>, vector<1x32x32xbf16>
    %104 = vector.shape_cast %103 : vector<1x32x32xbf16> to vector<32x32xbf16>
    %cst_92 = arith.constant dense<0.000000e+00> : vector<8x32xf32>
    %105 = tpu.matmul %102, %104, %cst_92 {dimension_numbers = #tpu.dot_dimension_numbers<[1], [0], [0], [1], [0, 0, 1, 1], [], []>} : vector<8x32xbf16>, vector<32x32xbf16>, vector<8x32xf32> -> vector<8x32xf32>
    %106 = arith.addf %99, %105 : vector<8x32xf32>
    %c0_93 = arith.constant 0 : index
    %c2_94 = arith.constant 2 : index
    %c0_95 = arith.constant 0 : index
    %107 = vector.load %arg32[%c0_93, %c2_94, %c0_95] : memref<1x16x32xf32, #tpu.memory_space<vmem>>, vector<1x8x32xf32>
    %108 = vector.shape_cast %107 : vector<1x8x32xf32> to vector<8x32xf32>
    %109 = arith.truncf %108 : vector<8x32xf32> to vector<8x32xbf16>
    %c2_96 = arith.constant 2 : index
    %c0_97 = arith.constant 0 : index
    %c0_98 = arith.constant 0 : index
    %110 = vector.load %arg10[%c2_96, %c0_97, %c0_98] : memref<3x32x32xbf16, #tpu.memory_space<vmem>>, vector<1x32x32xbf16>
    %111 = vector.shape_cast %110 : vector<1x32x32xbf16> to vector<32x32xbf16>
    %cst_99 = arith.constant dense<0.000000e+00> : vector<8x32xf32>
    %112 = tpu.matmul %109, %111, %cst_99 {dimension_numbers = #tpu.dot_dimension_numbers<[1], [0], [0], [1], [0, 0, 1, 1], [], []>} : vector<8x32xbf16>, vector<32x32xbf16>, vector<8x32xf32> -> vector<8x32xf32>
    %113 = arith.addf %106, %112 : vector<8x32xf32>
    %114 = vector.shape_cast %113 : vector<8x32xf32> to vector<1x8x32xf32>
    %c0_100 = arith.constant 0 : index
    %c0_101 = arith.constant 0 : index
    %115 = vector.load %arg11[%c0_100, %c0_101] : memref<1x32xf32, #tpu.memory_space<vmem>>, vector<1x32xf32>
    %116 = vector.shape_cast %115 : vector<1x32xf32> to vector<1x1x32xf32>
    %117 = vector.broadcast %116 : vector<1x1x32xf32> to vector<1x8x32xf32>
    %118 = arith.mulf %114, %117 : vector<1x8x32xf32>
    %c0_102 = arith.constant 0 : index
    %c0_103 = arith.constant 0 : index
    %119 = vector.load %arg12[%c0_102, %c0_103] : memref<1x32xf32, #tpu.memory_space<vmem>>, vector<1x32xf32>
    %120 = vector.shape_cast %119 : vector<1x32xf32> to vector<1x1x32xf32>
    %121 = vector.broadcast %120 : vector<1x1x32xf32> to vector<1x8x32xf32>
    %122 = arith.addf %118, %121 : vector<1x8x32xf32>
    %cst_104 = arith.constant 0.000000e+00 : f32
    %123 = vector.broadcast %cst_104 : f32 to vector<1x8x32xf32>
    %124 = arith.maximumf %122, %123 : vector<1x8x32xf32>
    %c0_105 = arith.constant 0 : index
    %c0_106 = arith.constant 0 : index
    %c0_107 = arith.constant 0 : index
    %125 = vector.load %arg32[%c0_105, %c0_106, %c0_107] : memref<1x16x32xf32, #tpu.memory_space<vmem>>, vector<1x8x32xf32>
    tpu.vector_store %arg32[%c0_105, %c0_106, %c0_107], %124 {strides = array<i32>} : memref<1x16x32xf32, #tpu.memory_space<vmem>>, vector<1x8x32xf32>,
    %cst_108 = arith.constant 0.000000e+00 : f32
    %126 = vector.broadcast %cst_108 : f32 to vector<8x32xf32>
    %c0_109 = arith.constant 0 : index
    %c0_110 = arith.constant 0 : index
    %c0_111 = arith.constant 0 : index
    %127 = vector.load %arg32[%c0_109, %c0_110, %c0_111] : memref<1x16x32xf32, #tpu.memory_space<vmem>>, vector<1x8x32xf32>
    %128 = vector.shape_cast %127 : vector<1x8x32xf32> to vector<8x32xf32>
    %129 = arith.truncf %128 : vector<8x32xf32> to vector<8x32xbf16>
    %c0_112 = arith.constant 0 : index
    %c0_113 = arith.constant 0 : index
    %c0_114 = arith.constant 0 : index
    %130 = vector.load %arg13[%c0_112, %c0_113, %c0_114] : memref<1x32x32xbf16, #tpu.memory_space<vmem>>, vector<1x32x32xbf16>
    %131 = vector.shape_cast %130 : vector<1x32x32xbf16> to vector<32x32xbf16>
    %cst_115 = arith.constant dense<0.000000e+00> : vector<8x32xf32>
    %132 = tpu.matmul %129, %131, %cst_115 {dimension_numbers = #tpu.dot_dimension_numbers<[1], [0], [0], [1], [0, 0, 1, 1], [], []>} : vector<8x32xbf16>, vector<32x32xbf16>, vector<8x32xf32> -> vector<8x32xf32>
    %133 = arith.addf %126, %132 : vector<8x32xf32>
    %134 = vector.shape_cast %133 : vector<8x32xf32> to vector<1x8x32xf32>
    %c0_116 = arith.constant 0 : index
    %c0_117 = arith.constant 0 : index
    %135 = vector.load %arg14[%c0_116, %c0_117] : memref<1x32xf32, #tpu.memory_space<vmem>>, vector<1x32xf32>
    %136 = vector.shape_cast %135 : vector<1x32xf32> to vector<1x1x32xf32>
    %137 = vector.broadcast %136 : vector<1x1x32xf32> to vector<1x8x32xf32>
    %138 = arith.mulf %134, %137 : vector<1x8x32xf32>
    %c0_118 = arith.constant 0 : index
    %c0_119 = arith.constant 0 : index
    %139 = vector.load %arg15[%c0_118, %c0_119] : memref<1x32xf32, #tpu.memory_space<vmem>>, vector<1x32xf32>
    %140 = vector.shape_cast %139 : vector<1x32xf32> to vector<1x1x32xf32>
    %141 = vector.broadcast %140 : vector<1x1x32xf32> to vector<1x8x32xf32>
    %142 = arith.addf %138, %141 : vector<1x8x32xf32>
    %cst_120 = arith.constant 0.000000e+00 : f32
    %143 = vector.broadcast %cst_120 : f32 to vector<1x8x32xf32>
    %144 = arith.maximumf %142, %143 : vector<1x8x32xf32>
    %c0_121 = arith.constant 0 : index
    %c0_122 = arith.constant 0 : index
    %c0_123 = arith.constant 0 : index
    %145 = vector.load %arg32[%c0_121, %c0_122, %c0_123] : memref<1x16x32xf32, #tpu.memory_space<vmem>>, vector<1x8x32xf32>
    tpu.vector_store %arg32[%c0_121, %c0_122, %c0_123], %144 {strides = array<i32>} : memref<1x16x32xf32, #tpu.memory_space<vmem>>, vector<1x8x32xf32>,
    %cst_124 = arith.constant 0.000000e+00 : f32
    %146 = vector.broadcast %cst_124 : f32 to vector<8x32xf32>
    %c0_125 = arith.constant 0 : index
    %c0_126 = arith.constant 0 : index
    %c0_127 = arith.constant 0 : index
    %147 = vector.load %arg32[%c0_125, %c0_126, %c0_127] : memref<1x16x32xf32, #tpu.memory_space<vmem>>, vector<1x8x32xf32>
    %148 = vector.shape_cast %147 : vector<1x8x32xf32> to vector<8x32xf32>
    %149 = arith.truncf %148 : vector<8x32xf32> to vector<8x32xbf16>
    %c0_128 = arith.constant 0 : index
    %c0_129 = arith.constant 0 : index
    %c0_130 = arith.constant 0 : index
    %150 = vector.load %arg16[%c0_128, %c0_129, %c0_130] : memref<1x32x32xbf16, #tpu.memory_space<vmem>>, vector<1x32x32xbf16>
    %151 = vector.shape_cast %150 : vector<1x32x32xbf16> to vector<32x32xbf16>
    %cst_131 = arith.constant dense<0.000000e+00> : vector<8x32xf32>
    %152 = tpu.matmul %149, %151, %cst_131 {dimension_numbers = #tpu.dot_dimension_numbers<[1], [0], [0], [1], [0, 0, 1, 1], [], []>} : vector<8x32xbf16>, vector<32x32xbf16>, vector<8x32xf32> -> vector<8x32xf32>
    %153 = arith.addf %146, %152 : vector<8x32xf32>
    %154 = vector.shape_cast %153 : vector<8x32xf32> to vector<1x8x32xf32>
    %c0_132 = arith.constant 0 : index
    %c0_133 = arith.constant 0 : index
    %155 = vector.load %arg17[%c0_132, %c0_133] : memref<1x32xf32, #tpu.memory_space<vmem>>, vector<1x32xf32>
    %156 = vector.shape_cast %155 : vector<1x32xf32> to vector<1x1x32xf32>
    %157 = vector.broadcast %156 : vector<1x1x32xf32> to vector<1x8x32xf32>
    %158 = arith.mulf %154, %157 : vector<1x8x32xf32>
    %c0_134 = arith.constant 0 : index
    %c0_135 = arith.constant 0 : index
    %159 = vector.load %arg18[%c0_134, %c0_135] : memref<1x32xf32, #tpu.memory_space<vmem>>, vector<1x32xf32>
    %160 = vector.shape_cast %159 : vector<1x32xf32> to vector<1x1x32xf32>
    %161 = vector.broadcast %160 : vector<1x1x32xf32> to vector<1x8x32xf32>
    %162 = arith.addf %158, %161 : vector<1x8x32xf32>
    %cst_136 = arith.constant 0.000000e+00 : f32
    %163 = vector.broadcast %cst_136 : f32 to vector<1x8x32xf32>
    %164 = arith.maximumf %162, %163 : vector<1x8x32xf32>
    %c0_137 = arith.constant 0 : index
    %c0_138 = arith.constant 0 : index
    %165 = vector.load %arg19[%c0_137, %c0_138] : memref<1x32xf32, #tpu.memory_space<vmem>>, vector<1x32xf32>
    %166 = vector.shape_cast %165 : vector<1x32xf32> to vector<1x1x32xf32>
    %167 = vector.broadcast %166 : vector<1x1x32xf32> to vector<1x8x32xf32>
    %168 = arith.mulf %164, %167 : vector<1x8x32xf32>
    %cst_139 = arith.constant dense<0.000000e+00> : vector<1x8xf32>
    %169 = vector.multi_reduction <add>, %168, %cst_139 [2] : vector<1x8x32xf32> to vector<1x8xf32>
    %170 = vector.shape_cast %169 : vector<1x8xf32> to vector<1x8x1xf32>
    %c0_140 = arith.constant 0 : index
    %c0_141 = arith.constant 0 : index
    %171 = vector.load %arg20[%c0_140, %c0_141] : memref<1x1xf32, #tpu.memory_space<vmem>>, vector<1x1xf32>
    %172 = vector.shape_cast %171 : vector<1x1xf32> to vector<1x1x1xf32>
    %173 = vector.broadcast %172 : vector<1x1x1xf32> to vector<1x8x1xf32>
    %174 = arith.addf %170, %173 : vector<1x8x1xf32>
    %cst_142 = arith.constant dense<0xFF800000> : vector<1x1xf32>
    %175 = vector.multi_reduction <maximumf>, %174, %cst_142 [1] : vector<1x8x1xf32> to vector<1x1xf32>
    %176 = vector.shape_cast %175 : vector<1x1xf32> to vector<1x1x1xf32>
    %177 = vector.broadcast %176 : vector<1x1x1xf32> to vector<1x8x1xf32>
    %178 = arith.subf %174, %177 : vector<1x8x1xf32>
    %179 = math.exp %178 : vector<1x8x1xf32>
    %cst_143 = arith.constant dense<0.000000e+00> : vector<1x1xf32>
    %180 = vector.multi_reduction <add>, %179, %cst_143 [1] : vector<1x8x1xf32> to vector<1x1xf32>
    %181 = vector.shape_cast %180 : vector<1x1xf32> to vector<1x1x1xf32>
    %182 = tpu.reciprocal %181 : vector<1x1x1xf32> -> vector<1x1x1xf32>
    %183 = vector.broadcast %182 : vector<1x1x1xf32> to vector<1x8x1xf32>
    %184 = arith.mulf %179, %183 : vector<1x8x1xf32>
    %185 = vector.broadcast %184 : vector<1x8x1xf32> to vector<1x8x32xf32>
    %186 = arith.mulf %185, %164 : vector<1x8x32xf32>
    %cst_144 = arith.constant dense<0.000000e+00> : vector<1x32xf32>
    %187 = vector.multi_reduction <add>, %186, %cst_144 [1] : vector<1x8x32xf32> to vector<1x32xf32>
    %188 = vector.shape_cast %187 : vector<1x32xf32> to vector<1x1x32xf32>
    %189 = vector.broadcast %188 : vector<1x1x32xf32> to vector<1x8x32xf32>
    %190 = arith.subf %164, %189 : vector<1x8x32xf32>
    %191 = arith.mulf %190, %190 : vector<1x8x32xf32>
    %192 = vector.broadcast %184 : vector<1x8x1xf32> to vector<1x8x32xf32>
    %193 = arith.mulf %192, %191 : vector<1x8x32xf32>
    %cst_145 = arith.constant dense<0.000000e+00> : vector<1x32xf32>
    %194 = vector.multi_reduction <add>, %193, %cst_145 [1] : vector<1x8x32xf32> to vector<1x32xf32>
    %cst_146 = arith.constant 9.99999997E-7 : f32
    %195 = vector.broadcast %cst_146 : f32 to vector<1x32xf32>
    %196 = arith.addf %194, %195 : vector<1x32xf32>
    %197 = math.sqrt %196 : vector<1x32xf32>
    %198 = arith.truncf %187 : vector<1x32xf32> to vector<1x32xbf16>
    %c0_147 = arith.constant 0 : index
    %c0_148 = arith.constant 0 : index
    %199 = vector.load %arg21[%c0_147, %c0_148] : memref<32x32xbf16, #tpu.memory_space<vmem>>, vector<32x32xbf16>
    %cst_149 = arith.constant dense<0.000000e+00> : vector<1x32xf32>
    %200 = tpu.matmul %198, %199, %cst_149 {dimension_numbers = #tpu.dot_dimension_numbers<[1], [0], [0], [1], [0, 0, 1, 1], [], []>} : vector<1x32xbf16>, vector<32x32xbf16>, vector<1x32xf32> -> vector<1x32xf32>
    %201 = arith.truncf %197 : vector<1x32xf32> to vector<1x32xbf16>
    %c0_150 = arith.constant 0 : index
    %c0_151 = arith.constant 0 : index
    %202 = vector.load %arg22[%c0_150, %c0_151] : memref<32x32xbf16, #tpu.memory_space<vmem>>, vector<32x32xbf16>
    %cst_152 = arith.constant dense<0.000000e+00> : vector<1x32xf32>
    %203 = tpu.matmul %201, %202, %cst_152 {dimension_numbers = #tpu.dot_dimension_numbers<[1], [0], [0], [1], [0, 0, 1, 1], [], []>} : vector<1x32xbf16>, vector<32x32xbf16>, vector<1x32xf32> -> vector<1x32xf32>
    %204 = arith.addf %200, %203 : vector<1x32xf32>
    %c0_153 = arith.constant 0 : index
    %c0_154 = arith.constant 0 : index
    %205 = vector.load %arg23[%c0_153, %c0_154] : memref<1x32xf32, #tpu.memory_space<vmem>>, vector<1x32xf32>
    %206 = arith.mulf %204, %205 : vector<1x32xf32>
    %c0_155 = arith.constant 0 : index
    %c0_156 = arith.constant 0 : index
    %207 = vector.load %arg24[%c0_155, %c0_156] : memref<1x32xf32, #tpu.memory_space<vmem>>, vector<1x32xf32>
    %208 = arith.addf %206, %207 : vector<1x32xf32>
    %cst_157 = arith.constant 0.000000e+00 : f32
    %209 = vector.broadcast %cst_157 : f32 to vector<1x32xf32>
    %210 = arith.maximumf %208, %209 : vector<1x32xf32>
    %211 = arith.truncf %210 : vector<1x32xf32> to vector<1x32xbf16>
    %c0_158 = arith.constant 0 : index
    %c0_159 = arith.constant 0 : index
    %212 = vector.load %arg25[%c0_158, %c0_159] : memref<32x32xbf16, #tpu.memory_space<vmem>>, vector<32x32xbf16>
    %cst_160 = arith.constant dense<0.000000e+00> : vector<1x32xf32>
    %213 = tpu.matmul %211, %212, %cst_160 {dimension_numbers = #tpu.dot_dimension_numbers<[1], [0], [0], [1], [0, 0, 1, 1], [], []>} : vector<1x32xbf16>, vector<32x32xbf16>, vector<1x32xf32> -> vector<1x32xf32>
    %c0_161 = arith.constant 0 : index
    %c0_162 = arith.constant 0 : index
    %214 = vector.load %arg26[%c0_161, %c0_162] : memref<1x32xf32, #tpu.memory_space<vmem>>, vector<1x32xf32>
    %215 = arith.mulf %213, %214 : vector<1x32xf32>
    %c0_163 = arith.constant 0 : index
    %c0_164 = arith.constant 0 : index
    %216 = vector.load %arg27[%c0_163, %c0_164] : memref<1x32xf32, #tpu.memory_space<vmem>>, vector<1x32xf32>
    %217 = arith.addf %215, %216 : vector<1x32xf32>
    %cst_165 = arith.constant 0.000000e+00 : f32
    %218 = vector.broadcast %cst_165 : f32 to vector<1x32xf32>
    %219 = arith.maximumf %217, %218 : vector<1x32xf32>
    %220 = arith.truncf %219 : vector<1x32xf32> to vector<1x32xbf16>
    %c0_166 = arith.constant 0 : index
    %c0_167 = arith.constant 0 : index
    %221 = vector.load %arg28[%c0_166, %c0_167] : memref<32x8xbf16, #tpu.memory_space<vmem>>, vector<32x8xbf16>
    %cst_168 = arith.constant dense<0.000000e+00> : vector<1x8xf32>
    %222 = tpu.matmul %220, %221, %cst_168 {dimension_numbers = #tpu.dot_dimension_numbers<[1], [0], [0], [1], [0, 0, 1, 1], [], []>} : vector<1x32xbf16>, vector<32x8xbf16>, vector<1x8xf32> -> vector<1x8xf32>
    %c0_169 = arith.constant 0 : index
    %c0_170 = arith.constant 0 : index
    %223 = vector.load %arg29[%c0_169, %c0_170] : memref<1x8xf32, #tpu.memory_space<vmem>>, vector<1x8xf32>
    %224 = arith.mulf %222, %223 : vector<1x8xf32>
    %c0_171 = arith.constant 0 : index
    %c0_172 = arith.constant 0 : index
    %225 = vector.load %arg30[%c0_171, %c0_172] : memref<1x8xf32, #tpu.memory_space<vmem>>, vector<1x8xf32>
    %226 = arith.addf %224, %225 : vector<1x8xf32>
    %227 = vector.shape_cast %226 : vector<1x8xf32> to vector<1x1x8xf32>
    %c0_173 = arith.constant 0 : index
    %c0_174 = arith.constant 0 : index
    %c0_175 = arith.constant 0 : index
    %228 = vector.load %arg31[%c0_173, %c0_174, %c0_175] : memref<1x1x8xf32, #tpu.memory_space<vmem>>, vector<1x1x8xf32>
    tpu.vector_store %arg31[%c0_173, %c0_174, %c0_175], %227 {strides = array<i32>} : memref<1x1x8xf32, #tpu.memory_space<vmem>>, vector<1x1x8xf32>,
    return
  }
  func.func @transform_0(%arg0: i32) -> (i32, i32, i32) {
    %c0_i32 = arith.constant 0 : i32
    %c0_i32_0 = arith.constant 0 : i32
    %c0_i32_1 = arith.constant 0 : i32
    return %arg0, %c0_i32, %c0_i32_0 : i32, i32, i32
  }
  func.func @transform_1(%arg0: i32) -> (i32, i32) {
    %c0_i32 = arith.constant 0 : i32
    %c0_i32_0 = arith.constant 0 : i32
    %c0_i32_1 = arith.constant 0 : i32
    return %c0_i32, %c0_i32_0 : i32, i32
  }
  func.func @transform_2(%arg0: i32) -> (i32, i32) {
    %c0_i32 = arith.constant 0 : i32
    %c0_i32_0 = arith.constant 0 : i32
    %c0_i32_1 = arith.constant 0 : i32
    return %c0_i32, %c0_i32_0 : i32, i32
  }
  func.func @transform_3(%arg0: i32) -> (i32, i32, i32) {
    %c0_i32 = arith.constant 0 : i32
    %c0_i32_0 = arith.constant 0 : i32
    %c0_i32_1 = arith.constant 0 : i32
    %c0_i32_2 = arith.constant 0 : i32
    return %c0_i32, %c0_i32_0, %c0_i32_1 : i32, i32, i32
  }
  func.func @transform_4(%arg0: i32) -> (i32, i32) {
    %c0_i32 = arith.constant 0 : i32
    %c0_i32_0 = arith.constant 0 : i32
    %c0_i32_1 = arith.constant 0 : i32
    return %c0_i32, %c0_i32_0 : i32, i32
  }
  func.func @transform_5(%arg0: i32) -> (i32, i32) {
    %c0_i32 = arith.constant 0 : i32
    %c0_i32_0 = arith.constant 0 : i32
    %c0_i32_1 = arith.constant 0 : i32
    return %c0_i32, %c0_i32_0 : i32, i32
  }
  func.func @transform_6(%arg0: i32) -> (i32, i32, i32) {
    %c0_i32 = arith.constant 0 : i32
    %c0_i32_0 = arith.constant 0 : i32
    %c0_i32_1 = arith.constant 0 : i32
    %c0_i32_2 = arith.constant 0 : i32
    return %c0_i32, %c0_i32_0, %c0_i32_1 : i32, i32, i32
  }
  func.func @transform_7(%arg0: i32) -> (i32, i32) {
    %c0_i32 = arith.constant 0 : i32
    %c0_i32_0 = arith.constant 0 : i32
    %c0_i32_1 = arith.constant 0 : i32
    return %c0_i32, %c0_i32_0 : i32, i32
  }
  func.func @transform_8(%arg0: i32) -> (i32, i32) {
    %c0_i32 = arith.constant 0 : i32
    %c0_i32_0 = arith.constant 0 : i32
    %c0_i32_1 = arith.constant 0 : i32
    return %c0_i32, %c0_i32_0 : i32, i32
  }
  func.func @transform_9(%arg0: i32) -> (i32, i32, i32) {
    %c0_i32 = arith.constant 0 : i32
    %c0_i32_0 = arith.constant 0 : i32
    %c0_i32_1 = arith.constant 0 : i32
    %c0_i32_2 = arith.constant 0 : i32
    return %c0_i32, %c0_i32_0, %c0_i32_1 : i32, i32, i32
  }
  func.func @transform_10(%arg0: i32) -> (i32, i32) {
    %c0_i32 = arith.constant 0 : i32
    %c0_i32_0 = arith.constant 0 : i32
    %c0_i32_1 = arith.constant 0 : i32
    return %c0_i32, %c0_i32_0 : i32, i32
  }
  func.func @transform_11(%arg0: i32) -> (i32, i32) {
    %c0_i32 = arith.constant 0 : i32
    %c0_i32_0 = arith.constant 0 : i32
    %c0_i32_1 = arith.constant 0 : i32
    return %c0_i32, %c0_i32_0 : i32, i32
  }
  func.func @transform_12(%arg0: i32) -> (i32, i32, i32) {
    %c0_i32 = arith.constant 0 : i32
    %c0_i32_0 = arith.constant 0 : i32
    %c0_i32_1 = arith.constant 0 : i32
    %c0_i32_2 = arith.constant 0 : i32
    return %c0_i32, %c0_i32_0, %c0_i32_1 : i32, i32, i32
  }
  func.func @transform_13(%arg0: i32) -> (i32, i32) {
    %c0_i32 = arith.constant 0 : i32
    %c0_i32_0 = arith.constant 0 : i32
    %c0_i32_1 = arith.constant 0 : i32
    return %c0_i32, %c0_i32_0 : i32, i32
  }
  func.func @transform_14(%arg0: i32) -> (i32, i32) {
    %c0_i32 = arith.constant 0 : i32
    %c0_i32_0 = arith.constant 0 : i32
    %c0_i32_1 = arith.constant 0 : i32
    return %c0_i32, %c0_i32_0 : i32, i32
  }
  func.func @transform_15(%arg0: i32) -> (i32, i32, i32) {
    %c0_i32 = arith.constant 0 : i32
    %c0_i32_0 = arith.constant 0 : i32
    %c0_i32_1 = arith.constant 0 : i32
    %c0_i32_2 = arith.constant 0 : i32
    return %c0_i32, %c0_i32_0, %c0_i32_1 : i32, i32, i32
  }
  func.func @transform_16(%arg0: i32) -> (i32, i32) {
    %c0_i32 = arith.constant 0 : i32
    %c0_i32_0 = arith.constant 0 : i32
    %c0_i32_1 = arith.constant 0 : i32
    return %c0_i32, %c0_i32_0 : i32, i32
  }
  func.func @transform_17(%arg0: i32) -> (i32, i32) {
    %c0_i32 = arith.constant 0 : i32
    %c0_i32_0 = arith.constant 0 : i32
    %c0_i32_1 = arith.constant 0 : i32
    return %c0_i32, %c0_i32_0 : i32, i32
  }
  func.func @transform_18(%arg0: i32) -> (i32, i32) {
    %c0_i32 = arith.constant 0 : i32
    %c0_i32_0 = arith.constant 0 : i32
    %c0_i32_1 = arith.constant 0 : i32
    return %c0_i32, %c0_i32_0 : i32, i32
  }
  func.func @transform_19(%arg0: i32) -> (i32, i32) {
    %c0_i32 = arith.constant 0 : i32
    %c0_i32_0 = arith.constant 0 : i32
    %c0_i32_1 = arith.constant 0 : i32
    return %c0_i32, %c0_i32_0 : i32, i32
  }
  func.func @transform_20(%arg0: i32) -> (i32, i32) {
    %c0_i32 = arith.constant 0 : i32
    %c0_i32_0 = arith.constant 0 : i32
    %c0_i32_1 = arith.constant 0 : i32
    return %c0_i32, %c0_i32_0 : i32, i32
  }
  func.func @transform_21(%arg0: i32) -> (i32, i32) {
    %c0_i32 = arith.constant 0 : i32
    %c0_i32_0 = arith.constant 0 : i32
    %c0_i32_1 = arith.constant 0 : i32
    return %c0_i32, %c0_i32_0 : i32, i32
  }
  func.func @transform_22(%arg0: i32) -> (i32, i32) {
    %c0_i32 = arith.constant 0 : i32
    %c0_i32_0 = arith.constant 0 : i32
    %c0_i32_1 = arith.constant 0 : i32
    return %c0_i32, %c0_i32_0 : i32, i32
  }
  func.func @transform_23(%arg0: i32) -> (i32, i32) {
    %c0_i32 = arith.constant 0 : i32
    %c0_i32_0 = arith.constant 0 : i32
    %c0_i32_1 = arith.constant 0 : i32
    return %c0_i32, %c0_i32_0 : i32, i32
  }
  func.func @transform_24(%arg0: i32) -> (i32, i32) {
    %c0_i32 = arith.constant 0 : i32
    %c0_i32_0 = arith.constant 0 : i32
    %c0_i32_1 = arith.constant 0 : i32
    return %c0_i32, %c0_i32_0 : i32, i32
  }
  func.func @transform_25(%arg0: i32) -> (i32, i32) {
    %c0_i32 = arith.constant 0 : i32
    %c0_i32_0 = arith.constant 0 : i32
    %c0_i32_1 = arith.constant 0 : i32
    return %c0_i32, %c0_i32_0 : i32, i32
  }
  func.func @transform_26(%arg0: i32) -> (i32, i32) {
    %c0_i32 = arith.constant 0 : i32
    %c0_i32_0 = arith.constant 0 : i32
    %c0_i32_1 = arith.constant 0 : i32
    return %c0_i32, %c0_i32_0 : i32, i32
  }
  func.func @transform_27(%arg0: i32) -> (i32, i32) {
    %c0_i32 = arith.constant 0 : i32
    %c0_i32_0 = arith.constant 0 : i32
    %c0_i32_1 = arith.constant 0 : i32
    return %c0_i32, %c0_i32_0 : i32, i32
  }
  func.func @transform_28(%arg0: i32) -> (i32, i32) {
    %c0_i32 = arith.constant 0 : i32
    %c0_i32_0 = arith.constant 0 : i32
    %c0_i32_1 = arith.constant 0 : i32
    return %c0_i32, %c0_i32_0 : i32, i32
  }
  func.func @transform_29(%arg0: i32) -> (i32, i32) {
    %c0_i32 = arith.constant 0 : i32
    %c0_i32_0 = arith.constant 0 : i32
    %c0_i32_1 = arith.constant 0 : i32
    return %c0_i32, %c0_i32_0 : i32, i32
  }
  func.func @transform_30(%arg0: i32) -> (i32, i32, i32) {
    %c0_i32 = arith.constant 0 : i32
    %c0_i32_0 = arith.constant 0 : i32
    %c0_i32_1 = arith.constant 0 : i32
    return %arg0, %c0_i32, %c0_i32_0 : i32, i32, i32
  }
}

</mosaic_0001>

<llo_original>
// kernel: tdnn_forward.1
$region0: #{tdnn_forward.1}
  #allocation0 [shape = 'u32[]', space=smem, size = 0x4, offset = 0x4, fixed_abs, tag = 'smem constant byte address 0x4 - core index']
  #allocation1 [shape = 'u32[72,128]{1,0:T(1,128)}', space=vmem, size = 0x9000, scoped, tag = 'internal scratch']
  #allocation2 [shape = 'f32[1,16,32]{2,1,0:T(8,128)}', space=vmem, size = 0x2000, scoped, tag = 'scratch operand']
  #allocation3 [shape = 'f32[1,1]{1,0:T(1,128)S(1)}', space=vmem, size = 0x200, scoped, tag = 'scoped memory for tdnn_forward.1']
  %s0 = inlined_call_operand.smem [shape: u32[31], index: -1, kind: input, shape index: {}]
  %s1 = sld [smem:[%s0]]
  %s2 = scalar_lea.smem %s0, 1
  %s3 = sld [smem:[%s2]]
  %s4 = scalar_lea.smem %s0, 2
  %s5 = sld [smem:[%s4]]
  %s6 = scalar_lea.smem %s0, 3
  %s7 = sld [smem:[%s6]]
  %s8 = scalar_lea.smem %s0, 4
  %s9 = sld [smem:[%s8]]
  %s10 = scalar_lea.smem %s0, 5
  %s11 = sld [smem:[%s10]]
  %s12 = scalar_lea.smem %s0, 6
  %s13 = sld [smem:[%s12]]
  %s14 = scalar_lea.smem %s0, 7
  %s15 = sld [smem:[%s14]]
  %s16 = scalar_lea.smem %s0, 8
  %s17 = sld [smem:[%s16]]
  %s18 = scalar_lea.smem %s0, 9
  %s19 = sld [smem:[%s18]]
  %s20 = scalar_lea.smem %s0, 10
  %s21 = sld [smem:[%s20]]
  %s22 = scalar_lea.smem %s0, 11
  %s23 = sld [smem:[%s22]]
  %s24 = scalar_lea.smem %s0, 12
  %s25 = sld [smem:[%s24]]
  %s26 = scalar_lea.smem %s0, 13
  %s27 = sld [smem:[%s26]]
  %s28 = scalar_lea.smem %s0, 14
  %s29 = sld [smem:[%s28]]
  %s30 = scalar_lea.smem %s0, 15
  %s31 = sld [smem:[%s30]]
  %s32 = scalar_lea.smem %s0, 16
  %s33 = sld [smem:[%s32]]
  %s34 = scalar_lea.smem %s0, 17
  %s35 = sld [smem:[%s34]]
  %s36 = scalar_lea.smem %s0, 18
  %s37 = sld [smem:[%s36]]
  %s38 = scalar_lea.smem %s0, 19
  %s39 = sld [smem:[%s38]]
  %s40 = scalar_lea.smem %s0, 20
  %s41 = sld [smem:[%s40]]
  %s42 = scalar_lea.smem %s0, 21
  %s43 = sld [smem:[%s42]]
  %s44 = scalar_lea.smem %s0, 22
  %s45 = sld [smem:[%s44]]
  %s46 = scalar_lea.smem %s0, 23
  %s47 = sld [smem:[%s46]]
  %s48 = scalar_lea.smem %s0, 24
  %s49 = sld [smem:[%s48]]
  %s50 = scalar_lea.smem %s0, 25
  %s51 = sld [smem:[%s50]]
  %s52 = scalar_lea.smem %s0, 26
  %s53 = sld [smem:[%s52]]
  %s54 = scalar_lea.smem %s0, 27
  %s55 = sld [smem:[%s54]]
  %s56 = scalar_lea.smem %s0, 28
  %s57 = sld [smem:[%s56]]
  %s58 = scalar_lea.smem %s0, 29
  %s59 = sld [smem:[%s58]]
  %s60 = scalar_lea.smem %s0, 30
  %s61 = sld [smem:[%s60]]
  %s62 = sld [smem:[#allocation0]]
  $region225: #{tdnn_forward.1} parent=0
    _
  %s64 = ssub.s32 1, %s62
  %s65 = scalar_select 0, %s64, %s62
  %v66 = vstv %s39
  %67 = vst [vmem:[#allocation3] sm:$0x1] %v66
  $region1: #{tdnn_forward.1} parent=0
    #allocation4 [shape = 'u8[16384]{0}', space=vmem, size = 0x4000, scoped, tag = 'input window, operand 0']
    #allocation5 [shape = 's32[2]{0}', space=sflag, size = 0x8, scoped, tag = 'scoped memory for tdnn_forward.1']
    #allocation6 [shape = 's32[2]{0}', space=sflag, size = 0x8, scoped, tag = 'scoped memory for tdnn_forward.1']
    #allocation7 [shape = 'u8[20480]{0}', space=vmem, size = 0x5000, scoped, tag = 'input window, operand 3, single buffered']
    #allocation8 [shape = 's32[1]{0}', space=sflag, size = 0x4, scoped, tag = 'scoped memory for tdnn_forward.1']
    #allocation9 [shape = 'u8[24576]{0}', space=vmem, size = 0x6000, scoped, tag = 'input window, operand 6, single buffered']
    #allocation10 [shape = 'u8[512]{0}', space=vmem, size = 0x400, scoped, tag = 'input window, operand 7, single buffered']
    #allocation11 [shape = 's32[1]{0}', space=sflag, size = 0x4, scoped, tag = 'scoped memory for tdnn_forward.1']
    #allocation12 [shape = 'u8[512]{0}', space=vmem, size = 0x400, scoped, tag = 'input window, operand 8, single buffered']
    #allocation13 [shape = 'u8[24576]{0}', space=vmem, size = 0x6000, scoped, tag = 'input window, operand 9, single buffered']
    #allocation14 [shape = 's32[1]{0}', space=sflag, size = 0x4, scoped, tag = 'scoped memory for tdnn_forward.1']
    #allocation15 [shape = 'u8[512]{0}', space=vmem, size = 0x400, scoped, tag = 'input window, operand 10, single buffered']
    #allocation16 [shape = 'u8[512]{0}', space=vmem, size = 0x400, scoped, tag = 'input window, operand 11, single buffered']
    #allocation17 [shape = 's32[1]{0}', space=sflag, size = 0x4, scoped, tag = 'scoped memory for tdnn_forward.1']
    #allocation18 [shape = 'u8[512]{0}', space=vmem, size = 0x400, scoped, tag = 'input window, operand 13, single buffered']
    #allocation19 [shape = 'u8[512]{0}', space=vmem, size = 0x400, scoped, tag = 'input window, operand 14, single buffered']
    #allocation20 [shape = 's32[1]{0}', space=sflag, size = 0x4, scoped, tag = 'scoped memory for tdnn_forward.1']
    #allocation21 [shape = 'u8[512]{0}', space=vmem, size = 0x400, scoped, tag = 'input window, operand 18, single buffered']
    #allocation22 [shape = 'u8[8192]{0}', space=vmem, size = 0x2000, scoped, tag = 'input window, operand 20, single buffered']
    #allocation23 [shape = 's32[1]{0}', space=sflag, size = 0x4, scoped, tag = 'scoped memory for tdnn_forward.1']
    #allocation24 [shape = 'u8[8192]{0}', space=vmem, size = 0x2000, scoped, tag = 'input window, operand 21, single buffered']
    #allocation25 [shape = 'u8[8192]{0}', space=vmem, size = 0x2000, scoped, tag = 'input window, operand 24, single buffered']
    #allocation26 [shape = 's32[1]{0}', space=sflag, size = 0x4, scoped, tag = 'scoped memory for tdnn_forward.1']
    #allocation27 [shape = 'u8[512]{0}', space=vmem, size = 0x400, scoped, tag = 'input window, operand 25, single buffered']
    #allocation28 [shape = 'u8[512]{0}', space=vmem, size = 0x400, scoped, tag = 'input window, operand 26, single buffered']
    #allocation29 [shape = 's32[1]{0}', space=sflag, size = 0x4, scoped, tag = 'scoped memory for tdnn_forward.1']
    #allocation30 [shape = 'u8[512]{0}', space=vmem, size = 0x400, scoped, tag = 'input window, operand 28, single buffered']
    #allocation31 [shape = 'u8[512]{0}', space=vmem, size = 0x400, scoped, tag = 'input window, operand 29, single buffered']
    #allocation32 [shape = 's32[1]{0}', space=sflag, size = 0x4, scoped, tag = 'scoped memory for tdnn_forward.1']
    #allocation33 [shape = 'u8[1024]{0}', space=vmem, size = 0x400, scoped, tag = 'output window, operand 0']
    %68 = vsyncpa [#allocation5], 0
    %s69 = scalar_lea.sflag [#allocation5], 1
    %70 = vsyncpa %s69, 0
    %71 = vsyncpa [#allocation8], 0
    %72 = vsyncpa [#allocation11], 0
    %73 = vsyncpa [#allocation14], 0
    %74 = vsyncpa [#allocation17], 0
    %75 = vsyncpa [#allocation20], 0
    %76 = vsyncpa [#allocation23], 0
    %77 = vsyncpa [#allocation26], 0
    %78 = vsyncpa [#allocation29], 0
    %79 = vsyncpa [#allocation32], 0
    %80 = vsyncpa [#allocation6], 0
    %s81 = scalar_lea.sflag [#allocation6], 1
    %82 = vsyncpa %s81, 0
    loop: start=0, step=1, limit=4
    $region2: #{tdnn_forward.1} parent=1 // loop_pre_header
      _
    $region3: #{tdnn_forward.1} parent=1 // loop_header
      %s84 = sphi 0, %s88
      %p85 = scmp.ge.s32.totalorder %s84, 4
      %s94 = sphi 0, %s96
      %s97 = sphi 0, %s94
      %s98 = sphi 0, %s97
      %s114 = sphi 0, %s98
      %s118 = sphi 0, %s118
      %s120 = sphi 0, %s118
      %s121 = sphi 0, %s120
      %s135 = sphi 0, %s121
      %s139 = sphi 0, %s139
      %s141 = sphi 0, %s139
      %s142 = sphi 0, %s141
      %s156 = sphi 0, %s142
      %s160 = sphi 0, %s160
      %s162 = sphi 0, %s160
      %s163 = sphi 0, %s162
      %s177 = sphi 0, %s163
      %s181 = sphi 0, %s181
      %s183 = sphi 0, %s181
      %s184 = sphi 0, %s183
      %s198 = sphi 0, %s184
      %s202 = sphi 0, %s202
      %s204 = sphi 0, %s202
      %s205 = sphi 0, %s204
      %s219 = sphi 0, %s205
      %s223 = sphi 0, %s223
      %s225 = sphi 0, %s223
      %s226 = sphi 0, %s225
      %s240 = sphi 0, %s226
      %s244 = sphi 0, %s244
      %s246 = sphi 0, %s244
      %s247 = sphi 0, %s246
      %s261 = sphi 0, %s247
      %s265 = sphi 0, %s265
      %s267 = sphi 0, %s265
      %s268 = sphi 0, %s267
      %s282 = sphi 0, %s268
      %s286 = sphi 0, %s286
      %s288 = sphi 0, %s286
      %s289 = sphi 0, %s288
      %s303 = sphi 0, %s289
      %s307 = sphi 0, %s307
      %s309 = sphi 0, %s307
      %s310 = sphi 0, %s309
      %s324 = sphi 0, %s310
      %s328 = sphi 0, %s328
      %s330 = sphi 0, %s328
      %s331 = sphi 0, %s330
      %s345 = sphi 0, %s331
      %s349 = sphi 0, %s349
      %s351 = sphi 0, %s349
      %s352 = sphi 0, %s351
      %s366 = sphi 0, %s352
      %s370 = sphi 0, %s370
      %s372 = sphi 0, %s370
      %s373 = sphi 0, %s372
      %s387 = sphi 0, %s373
      %s391 = sphi 0, %s391
      %s393 = sphi 0, %s391
      %s394 = sphi 0, %s393
      %s408 = sphi 0, %s394
      %s412 = sphi 0, %s412
      %s414 = sphi 0, %s412
      %s415 = sphi 0, %s414
      %s429 = sphi 0, %s415
      %s433 = sphi 0, %s433
      %s435 = sphi 0, %s433
      %s436 = sphi 0, %s435
      %s450 = sphi 0, %s436
      %s454 = sphi 0, %s454
      %s456 = sphi 0, %s454
      %s457 = sphi 0, %s456
      %s471 = sphi 0, %s457
      %s475 = sphi 0, %s475
      %s477 = sphi 0, %s475
      %s478 = sphi 0, %s477
      %s492 = sphi 0, %s478
      %s496 = sphi 0, %s496
      %s498 = sphi 0, %s496
      %s499 = sphi 0, %s498
      %s513 = sphi 0, %s499
      %s517 = sphi 0, %s517
      %s519 = sphi 0, %s517
      %s520 = sphi 0, %s519
      %s534 = sphi 0, %s520
      %s538 = sphi 0, %s538
      %s540 = sphi 0, %s538
      %s541 = sphi 0, %s540
      %s555 = sphi 0, %s541
      %s559 = sphi 0, %s559
      %s561 = sphi 0, %s559
      %s562 = sphi 0, %s561
      %s576 = sphi 0, %s562
      %s580 = sphi 0, %s580
      %s582 = sphi 0, %s580
      %s583 = sphi 0, %s582
      %s597 = sphi 0, %s583
      %s601 = sphi 0, %s601
      %s603 = sphi 0, %s601
      %s604 = sphi 0, %s603
      %s618 = sphi 0, %s604
      %s622 = sphi 0, %s622
      %s624 = sphi 0, %s622
      %s625 = sphi 0, %s624
      %s639 = sphi 0, %s625
      %s643 = sphi 0, %s643
      %s645 = sphi 0, %s643
      %s646 = sphi 0, %s645
      %s660 = sphi 0, %s646
      %s664 = sphi 0, %s664
      %s666 = sphi 0, %s664
      %s667 = sphi 0, %s666
      %s681 = sphi 0, %s667
      %s685 = sphi 0, %s685
      %s687 = sphi 0, %s685
      %s688 = sphi 0, %s687
      %s702 = sphi 0, %s688
      %s706 = sphi 0, %s706
      %s708 = sphi 0, %s706
      %s709 = sphi 0, %s708
      %s723 = sphi 0, %s709
      %s729 = sphi 0, %s731
      %s732 = sphi 0, %s729
      %s733 = sphi 0, %s732
      %s749 = sphi 0, %s733
    $region4: #{tdnn_forward.1} parent=1 // loop_header_branch
      %87 = sbr.rel (%p85) target = $region8
    $region5: #{tdnn_forward.1} parent=1 // loop_body
      %s89 = ssub.s32 %s84, 1
      %s90 = ssub.s32 %s84, 2
      %s91 = sadd.s32 %s84, 1
      %s92 = ssub.s32 %s84, %s91
      %p93 = scmp.eq.s32.totalorder %s92, 0
      %s95 = sadd.s32 %s94, 1
      %s96 = scalar_select %p93, %s94, %s95
      %p99 = pneg %p93
      %p100 = scmp.eq.s32.totalorder %s84, 1
      %p101 = por %p99, %p100
      %p102 = scmp.ne.s32.totalorder %s94, %s97
      %p103 = scmp.eq.s32.totalorder %s84, 0
      %p104 = por %p102, %p103
      %p105 = scmp.ne.s32.totalorder %s94, %s97
      %p106 = scmp.eq.s32.totalorder %s89, 1
      %p107 = por %p105, %p106
      %p108 = scmp.ne.s32.totalorder %s97, %s98
      %p109 = scmp.eq.s32.totalorder %s89, 0
      %p110 = por %p108, %p109
      %p111 = scmp.ne.s32.totalorder %s97, %s98
      %p112 = scmp.eq.s32.totalorder %s90, 1
      %p113 = por %p111, %p112
      %p115 = scmp.ne.s32.totalorder %s98, %s114
      %p116 = scmp.eq.s32.totalorder %s90, 0
      %p117 = por %p115, %p116
      %s119 = sadd.s32 %s118, 1
      %p122 = scmp.eq.s32.totalorder %s84, 1
      %p123 = scmp.ne.s32.totalorder %s118, %s120
      %p124 = scmp.eq.s32.totalorder %s84, 0
      %p125 = por %p123, %p124
      %p126 = scmp.ne.s32.totalorder %s118, %s120
      %p127 = scmp.eq.s32.totalorder %s89, 1
      %p128 = por %p126, %p127
      %p129 = scmp.ne.s32.totalorder %s120, %s121
      %p130 = scmp.eq.s32.totalorder %s89, 0
      %p131 = por %p129, %p130
      %p132 = scmp.ne.s32.totalorder %s120, %s121
      %p133 = scmp.eq.s32.totalorder %s90, 1
      %p134 = por %p132, %p133
      %p136 = scmp.ne.s32.totalorder %s121, %s135
      %p137 = scmp.eq.s32.totalorder %s90, 0
      %p138 = por %p136, %p137
      %s140 = sadd.s32 %s139, 1
      %p143 = scmp.eq.s32.totalorder %s84, 1
      %p144 = scmp.ne.s32.totalorder %s139, %s141
      %p145 = scmp.eq.s32.totalorder %s84, 0
      %p146 = por %p144, %p145
      %p147 = scmp.ne.s32.totalorder %s139, %s141
      %p148 = scmp.eq.s32.totalorder %s89, 1
      %p149 = por %p147, %p148
      %p150 = scmp.ne.s32.totalorder %s141, %s142
      %p151 = scmp.eq.s32.totalorder %s89, 0
      %p152 = por %p150, %p151
      %p153 = scmp.ne.s32.totalorder %s141, %s142
      %p154 = scmp.eq.s32.totalorder %s90, 1
      %p155 = por %p153, %p154
      %p157 = scmp.ne.s32.totalorder %s142, %s156
      %p158 = scmp.eq.s32.totalorder %s90, 0
      %p159 = por %p157, %p158
      %s161 = sadd.s32 %s160, 1
      %p164 = scmp.eq.s32.totalorder %s84, 1
      %p165 = scmp.ne.s32.totalorder %s160, %s162
      %p166 = scmp.eq.s32.totalorder %s84, 0
      %p167 = por %p165, %p166
      %p168 = scmp.ne.s32.totalorder %s160, %s162
      %p169 = scmp.eq.s32.totalorder %s89, 1
      %p170 = por %p168, %p169
      %p171 = scmp.ne.s32.totalorder %s162, %s163
      %p172 = scmp.eq.s32.totalorder %s89, 0
      %p173 = por %p171, %p172
      %p174 = scmp.ne.s32.totalorder %s162, %s163
      %p175 = scmp.eq.s32.totalorder %s90, 1
      %p176 = por %p174, %p175
      %p178 = scmp.ne.s32.totalorder %s163, %s177
      %p179 = scmp.eq.s32.totalorder %s90, 0
      %p180 = por %p178, %p179
      %s182 = sadd.s32 %s181, 1
      %p185 = scmp.eq.s32.totalorder %s84, 1
      %p186 = scmp.ne.s32.totalorder %s181, %s183
      %p187 = scmp.eq.s32.totalorder %s84, 0
      %p188 = por %p186, %p187
      %p189 = scmp.ne.s32.totalorder %s181, %s183
      %p190 = scmp.eq.s32.totalorder %s89, 1
      %p191 = por %p189, %p190
      %p192 = scmp.ne.s32.totalorder %s183, %s184
      %p193 = scmp.eq.s32.totalorder %s89, 0
      %p194 = por %p192, %p193
      %p195 = scmp.ne.s32.totalorder %s183, %s184
      %p196 = scmp.eq.s32.totalorder %s90, 1
      %p197 = por %p195, %p196
      %p199 = scmp.ne.s32.totalorder %s184, %s198
      %p200 = scmp.eq.s32.totalorder %s90, 0
      %p201 = por %p199, %p200
      %s203 = sadd.s32 %s202, 1
      %p206 = scmp.eq.s32.totalorder %s84, 1
      %p207 = scmp.ne.s32.totalorder %s202, %s204
      %p208 = scmp.eq.s32.totalorder %s84, 0
      %p209 = por %p207, %p208
      %p210 = scmp.ne.s32.totalorder %s202, %s204
      %p211 = scmp.eq.s32.totalorder %s89, 1
      %p212 = por %p210, %p211
      %p213 = scmp.ne.s32.totalorder %s204, %s205
      %p214 = scmp.eq.s32.totalorder %s89, 0
      %p215 = por %p213, %p214
      %p216 = scmp.ne.s32.totalorder %s204, %s205
      %p217 = scmp.eq.s32.totalorder %s90, 1
      %p218 = por %p216, %p217
      %p220 = scmp.ne.s32.totalorder %s205, %s219
      %p221 = scmp.eq.s32.totalorder %s90, 0
      %p222 = por %p220, %p221
      %s224 = sadd.s32 %s223, 1
      %p227 = scmp.eq.s32.totalorder %s84, 1
      %p228 = scmp.ne.s32.totalorder %s223, %s225
      %p229 = scmp.eq.s32.totalorder %s84, 0
      %p230 = por %p228, %p229
      %p231 = scmp.ne.s32.totalorder %s223, %s225
      %p232 = scmp.eq.s32.totalorder %s89, 1
      %p233 = por %p231, %p232
      %p234 = scmp.ne.s32.totalorder %s225, %s226
      %p235 = scmp.eq.s32.totalorder %s89, 0
      %p236 = por %p234, %p235
      %p237 = scmp.ne.s32.totalorder %s225, %s226
      %p238 = scmp.eq.s32.totalorder %s90, 1
      %p239 = por %p237, %p238
      %p241 = scmp.ne.s32.totalorder %s226, %s240
      %p242 = scmp.eq.s32.totalorder %s90, 0
      %p243 = por %p241, %p242
      %s245 = sadd.s32 %s244, 1
      %p248 = scmp.eq.s32.totalorder %s84, 1
      %p249 = scmp.ne.s32.totalorder %s244, %s246
      %p250 = scmp.eq.s32.totalorder %s84, 0
      %p251 = por %p249, %p250
      %p252 = scmp.ne.s32.totalorder %s244, %s246
      %p253 = scmp.eq.s32.totalorder %s89, 1
      %p254 = por %p252, %p253
      %p255 = scmp.ne.s32.totalorder %s246, %s247
      %p256 = scmp.eq.s32.totalorder %s89, 0
      %p257 = por %p255, %p256
      %p258 = scmp.ne.s32.totalorder %s246, %s247
      %p259 = scmp.eq.s32.totalorder %s90, 1
      %p260 = por %p258, %p259
      %p262 = scmp.ne.s32.totalorder %s247, %s261
      %p263 = scmp.eq.s32.totalorder %s90, 0
      %p264 = por %p262, %p263
      %s266 = sadd.s32 %s265, 1
      %p269 = scmp.eq.s32.totalorder %s84, 1
      %p270 = scmp.ne.s32.totalorder %s265, %s267
      %p271 = scmp.eq.s32.totalorder %s84, 0
      %p272 = por %p270, %p271
      %p273 = scmp.ne.s32.totalorder %s265, %s267
      %p274 = scmp.eq.s32.totalorder %s89, 1
      %p275 = por %p273, %p274
      %p276 = scmp.ne.s32.totalorder %s267, %s268
      %p277 = scmp.eq.s32.totalorder %s89, 0
      %p278 = por %p276, %p277
      %p279 = scmp.ne.s32.totalorder %s267, %s268
      %p280 = scmp.eq.s32.totalorder %s90, 1
      %p281 = por %p279, %p280
      %p283 = scmp.ne.s32.totalorder %s268, %s282
      %p284 = scmp.eq.s32.totalorder %s90, 0
      %p285 = por %p283, %p284
      %s287 = sadd.s32 %s286, 1
      %p290 = scmp.eq.s32.totalorder %s84, 1
      %p291 = scmp.ne.s32.totalorder %s286, %s288
      %p292 = scmp.eq.s32.totalorder %s84, 0
      %p293 = por %p291, %p292
      %p294 = scmp.ne.s32.totalorder %s286, %s288
      %p295 = scmp.eq.s32.totalorder %s89, 1
      %p296 = por %p294, %p295
      %p297 = scmp.ne.s32.totalorder %s288, %s289
      %p298 = scmp.eq.s32.totalorder %s89, 0
      %p299 = por %p297, %p298
      %p300 = scmp.ne.s32.totalorder %s288, %s289
      %p301 = scmp.eq.s32.totalorder %s90, 1
      %p302 = por %p300, %p301
      %p304 = scmp.ne.s32.totalorder %s289, %s303
      %p305 = scmp.eq.s32.totalorder %s90, 0
      %p306 = por %p304, %p305
      %s308 = sadd.s32 %s307, 1
      %p311 = scmp.eq.s32.totalorder %s84, 1
      %p312 = scmp.ne.s32.totalorder %s307, %s309
      %p313 = scmp.eq.s32.totalorder %s84, 0
      %p314 = por %p312, %p313
      %p315 = scmp.ne.s32.totalorder %s307, %s309
      %p316 = scmp.eq.s32.totalorder %s89, 1
      %p317 = por %p315, %p316
      %p318 = scmp.ne.s32.totalorder %s309, %s310
      %p319 = scmp.eq.s32.totalorder %s89, 0
      %p320 = por %p318, %p319
      %p321 = scmp.ne.s32.totalorder %s309, %s310
      %p322 = scmp.eq.s32.totalorder %s90, 1
      %p323 = por %p321, %p322
      %p325 = scmp.ne.s32.totalorder %s310, %s324
      %p326 = scmp.eq.s32.totalorder %s90, 0
      %p327 = por %p325, %p326
      %s329 = sadd.s32 %s328, 1
      %p332 = scmp.eq.s32.totalorder %s84, 1
      %p333 = scmp.ne.s32.totalorder %s328, %s330
      %p334 = scmp.eq.s32.totalorder %s84, 0
      %p335 = por %p333, %p334
      %p336 = scmp.ne.s32.totalorder %s328, %s330
      %p337 = scmp.eq.s32.totalorder %s89, 1
      %p338 = por %p336, %p337
      %p339 = scmp.ne.s32.totalorder %s330, %s331
      %p340 = scmp.eq.s32.totalorder %s89, 0
      %p341 = por %p339, %p340
      %p342 = scmp.ne.s32.totalorder %s330, %s331
      %p343 = scmp.eq.s32.totalorder %s90, 1
      %p344 = por %p342, %p343
      %p346 = scmp.ne.s32.totalorder %s331, %s345
      %p347 = scmp.eq.s32.totalorder %s90, 0
      %p348 = por %p346, %p347
      %s350 = sadd.s32 %s349, 1
      %p353 = scmp.eq.s32.totalorder %s84, 1
      %p354 = scmp.ne.s32.totalorder %s349, %s351
      %p355 = scmp.eq.s32.totalorder %s84, 0
      %p356 = por %p354, %p355
      %p357 = scmp.ne.s32.totalorder %s349, %s351
      %p358 = scmp.eq.s32.totalorder %s89, 1
      %p359 = por %p357, %p358
      %p360 = scmp.ne.s32.totalorder %s351, %s352
      %p361 = scmp.eq.s32.totalorder %s89, 0
      %p362 = por %p360, %p361
      %p363 = scmp.ne.s32.totalorder %s351, %s352
      %p364 = scmp.eq.s32.totalorder %s90, 1
      %p365 = por %p363, %p364
      %p367 = scmp.ne.s32.totalorder %s352, %s366
      %p368 = scmp.eq.s32.totalorder %s90, 0
      %p369 = por %p367, %p368
      %s371 = sadd.s32 %s370, 1
      %p374 = scmp.eq.s32.totalorder %s84, 1
      %p375 = scmp.ne.s32.totalorder %s370, %s372
      %p376 = scmp.eq.s32.totalorder %s84, 0
      %p377 = por %p375, %p376
      %p378 = scmp.ne.s32.totalorder %s370, %s372
      %p379 = scmp.eq.s32.totalorder %s89, 1
      %p380 = por %p378, %p379
      %p381 = scmp.ne.s32.totalorder %s372, %s373
      %p382 = scmp.eq.s32.totalorder %s89, 0
      %p383 = por %p381, %p382
      %p384 = scmp.ne.s32.totalorder %s372, %s373
      %p385 = scmp.eq.s32.totalorder %s90, 1
      %p386 = por %p384, %p385
      %p388 = scmp.ne.s32.totalorder %s373, %s387
      %p389 = scmp.eq.s32.totalorder %s90, 0
      %p390 = por %p388, %p389
      %s392 = sadd.s32 %s391, 1
      %p395 = scmp.eq.s32.totalorder %s84, 1
      %p396 = scmp.ne.s32.totalorder %s391, %s393
      %p397 = scmp.eq.s32.totalorder %s84, 0
      %p398 = por %p396, %p397
      %p399 = scmp.ne.s32.totalorder %s391, %s393
      %p400 = scmp.eq.s32.totalorder %s89, 1
      %p401 = por %p399, %p400
      %p402 = scmp.ne.s32.totalorder %s393, %s394
      %p403 = scmp.eq.s32.totalorder %s89, 0
      %p404 = por %p402, %p403
      %p405 = scmp.ne.s32.totalorder %s393, %s394
      %p406 = scmp.eq.s32.totalorder %s90, 1
      %p407 = por %p405, %p406
      %p409 = scmp.ne.s32.totalorder %s394, %s408
      %p410 = scmp.eq.s32.totalorder %s90, 0
      %p411 = por %p409, %p410
      %s413 = sadd.s32 %s412, 1
      %p416 = scmp.eq.s32.totalorder %s84, 1
      %p417 = scmp.ne.s32.totalorder %s412, %s414
      %p418 = scmp.eq.s32.totalorder %s84, 0
      %p419 = por %p417, %p418
      %p420 = scmp.ne.s32.totalorder %s412, %s414
      %p421 = scmp.eq.s32.totalorder %s89, 1
      %p422 = por %p420, %p421
      %p423 = scmp.ne.s32.totalorder %s414, %s415
      %p424 = scmp.eq.s32.totalorder %s89, 0
      %p425 = por %p423, %p424
      %p426 = scmp.ne.s32.totalorder %s414, %s415
      %p427 = scmp.eq.s32.totalorder %s90, 1
      %p428 = por %p426, %p427
      %p430 = scmp.ne.s32.totalorder %s415, %s429
      %p431 = scmp.eq.s32.totalorder %s90, 0
      %p432 = por %p430, %p431
      %s434 = sadd.s32 %s433, 1
      %p437 = scmp.eq.s32.totalorder %s84, 1
      %p438 = scmp.ne.s32.totalorder %s433, %s435
      %p439 = scmp.eq.s32.totalorder %s84, 0
      %p440 = por %p438, %p439
      %p441 = scmp.ne.s32.totalorder %s433, %s435
      %p442 = scmp.eq.s32.totalorder %s89, 1
      %p443 = por %p441, %p442
      %p444 = scmp.ne.s32.totalorder %s435, %s436
      %p445 = scmp.eq.s32.totalorder %s89, 0
      %p446 = por %p444, %p445
      %p447 = scmp.ne.s32.totalorder %s435, %s436
      %p448 = scmp.eq.s32.totalorder %s90, 1
      %p449 = por %p447, %p448
      %p451 = scmp.ne.s32.totalorder %s436, %s450
      %p452 = scmp.eq.s32.totalorder %s90, 0
      %p453 = por %p451, %p452
      %s455 = sadd.s32 %s454, 1
      %p458 = scmp.eq.s32.totalorder %s84, 1
      %p459 = scmp.ne.s32.totalorder %s454, %s456
      %p460 = scmp.eq.s32.totalorder %s84, 0
      %p461 = por %p459, %p460
      %p462 = scmp.ne.s32.totalorder %s454, %s456
      %p463 = scmp.eq.s32.totalorder %s89, 1
      %p464 = por %p462, %p463
      %p465 = scmp.ne.s32.totalorder %s456, %s457
      %p466 = scmp.eq.s32.totalorder %s89, 0
      %p467 = por %p465, %p466
      %p468 = scmp.ne.s32.totalorder %s456, %s457
      %p469 = scmp.eq.s32.totalorder %s90, 1
      %p470 = por %p468, %p469
      %p472 = scmp.ne.s32.totalorder %s457, %s471
      %p473 = scmp.eq.s32.totalorder %s90, 0
      %p474 = por %p472, %p473
      %s476 = sadd.s32 %s475, 1
      %p479 = scmp.eq.s32.totalorder %s84, 1
      %p480 = scmp.ne.s32.totalorder %s475, %s477
      %p481 = scmp.eq.s32.totalorder %s84, 0
      %p482 = por %p480, %p481
      %p483 = scmp.ne.s32.totalorder %s475, %s477
      %p484 = scmp.eq.s32.totalorder %s89, 1
      %p485 = por %p483, %p484
      %p486 = scmp.ne.s32.totalorder %s477, %s478
      %p487 = scmp.eq.s32.totalorder %s89, 0
      %p488 = por %p486, %p487
      %p489 = scmp.ne.s32.totalorder %s477, %s478
      %p490 = scmp.eq.s32.totalorder %s90, 1
      %p491 = por %p489, %p490
      %p493 = scmp.ne.s32.totalorder %s478, %s492
      %p494 = scmp.eq.s32.totalorder %s90, 0
      %p495 = por %p493, %p494
      %s497 = sadd.s32 %s496, 1
      %p500 = scmp.eq.s32.totalorder %s84, 1
      %p501 = scmp.ne.s32.totalorder %s496, %s498
      %p502 = scmp.eq.s32.totalorder %s84, 0
      %p503 = por %p501, %p502
      %p504 = scmp.ne.s32.totalorder %s496, %s498
      %p505 = scmp.eq.s32.totalorder %s89, 1
      %p506 = por %p504, %p505
      %p507 = scmp.ne.s32.totalorder %s498, %s499
      %p508 = scmp.eq.s32.totalorder %s89, 0
      %p509 = por %p507, %p508
      %p510 = scmp.ne.s32.totalorder %s498, %s499
      %p511 = scmp.eq.s32.totalorder %s90, 1
      %p512 = por %p510, %p511
      %p514 = scmp.ne.s32.totalorder %s499, %s513
      %p515 = scmp.eq.s32.totalorder %s90, 0
      %p516 = por %p514, %p515
      %s518 = sadd.s32 %s517, 1
      %p521 = scmp.eq.s32.totalorder %s84, 1
      %p522 = scmp.ne.s32.totalorder %s517, %s519
      %p523 = scmp.eq.s32.totalorder %s84, 0
      %p524 = por %p522, %p523
      %p525 = scmp.ne.s32.totalorder %s517, %s519
      %p526 = scmp.eq.s32.totalorder %s89, 1
      %p527 = por %p525, %p526
      %p528 = scmp.ne.s32.totalorder %s519, %s520
      %p529 = scmp.eq.s32.totalorder %s89, 0
      %p530 = por %p528, %p529
      %p531 = scmp.ne.s32.totalorder %s519, %s520
      %p532 = scmp.eq.s32.totalorder %s90, 1
      %p533 = por %p531, %p532
      %p535 = scmp.ne.s32.totalorder %s520, %s534
      %p536 = scmp.eq.s32.totalorder %s90, 0
      %p537 = por %p535, %p536
      %s539 = sadd.s32 %s538, 1
      %p542 = scmp.eq.s32.totalorder %s84, 1
      %p543 = scmp.ne.s32.totalorder %s538, %s540
      %p544 = scmp.eq.s32.totalorder %s84, 0
      %p545 = por %p543, %p544
      %p546 = scmp.ne.s32.totalorder %s538, %s540
      %p547 = scmp.eq.s32.totalorder %s89, 1
      %p548 = por %p546, %p547
      %p549 = scmp.ne.s32.totalorder %s540, %s541
      %p550 = scmp.eq.s32.totalorder %s89, 0
      %p551 = por %p549, %p550
      %p552 = scmp.ne.s32.totalorder %s540, %s541
      %p553 = scmp.eq.s32.totalorder %s90, 1
      %p554 = por %p552, %p553
      %p556 = scmp.ne.s32.totalorder %s541, %s555
      %p557 = scmp.eq.s32.totalorder %s90, 0
      %p558 = por %p556, %p557
      %s560 = sadd.s32 %s559, 1
      %p563 = scmp.eq.s32.totalorder %s84, 1
      %p564 = scmp.ne.s32.totalorder %s559, %s561
      %p565 = scmp.eq.s32.totalorder %s84, 0
      %p566 = por %p564, %p565
      %p567 = scmp.ne.s32.totalorder %s559, %s561
      %p568 = scmp.eq.s32.totalorder %s89, 1
      %p569 = por %p567, %p568
      %p570 = scmp.ne.s32.totalorder %s561, %s562
      %p571 = scmp.eq.s32.totalorder %s89, 0
      %p572 = por %p570, %p571
      %p573 = scmp.ne.s32.totalorder %s561, %s562
      %p574 = scmp.eq.s32.totalorder %s90, 1
      %p575 = por %p573, %p574
      %p577 = scmp.ne.s32.totalorder %s562, %s576
      %p578 = scmp.eq.s32.totalorder %s90, 0
      %p579 = por %p577, %p578
      %s581 = sadd.s32 %s580, 1
      %p584 = scmp.eq.s32.totalorder %s84, 1
      %p585 = scmp.ne.s32.totalorder %s580, %s582
      %p586 = scmp.eq.s32.totalorder %s84, 0
      %p587 = por %p585, %p586
      %p588 = scmp.ne.s32.totalorder %s580, %s582
      %p589 = scmp.eq.s32.totalorder %s89, 1
      %p590 = por %p588, %p589
      %p591 = scmp.ne.s32.totalorder %s582, %s583
      %p592 = scmp.eq.s32.totalorder %s89, 0
      %p593 = por %p591, %p592
      %p594 = scmp.ne.s32.totalorder %s582, %s583
      %p595 = scmp.eq.s32.totalorder %s90, 1
      %p596 = por %p594, %p595
      %p598 = scmp.ne.s32.totalorder %s583, %s597
      %p599 = scmp.eq.s32.totalorder %s90, 0
      %p600 = por %p598, %p599
      %s602 = sadd.s32 %s601, 1
      %p605 = scmp.eq.s32.totalorder %s84, 1
      %p606 = scmp.ne.s32.totalorder %s601, %s603
      %p607 = scmp.eq.s32.totalorder %s84, 0
      %p608 = por %p606, %p607
      %p609 = scmp.ne.s32.totalorder %s601, %s603
      %p610 = scmp.eq.s32.totalorder %s89, 1
      %p611 = por %p609, %p610
      %p612 = scmp.ne.s32.totalorder %s603, %s604
      %p613 = scmp.eq.s32.totalorder %s89, 0
      %p614 = por %p612, %p613
      %p615 = scmp.ne.s32.totalorder %s603, %s604
      %p616 = scmp.eq.s32.totalorder %s90, 1
      %p617 = por %p615, %p616
      %p619 = scmp.ne.s32.totalorder %s604, %s618
      %p620 = scmp.eq.s32.totalorder %s90, 0
      %p621 = por %p619, %p620
      %s623 = sadd.s32 %s622, 1
      %p626 = scmp.eq.s32.totalorder %s84, 1
      %p627 = scmp.ne.s32.totalorder %s622, %s624
      %p628 = scmp.eq.s32.totalorder %s84, 0
      %p629 = por %p627, %p628
      %p630 = scmp.ne.s32.totalorder %s622, %s624
      %p631 = scmp.eq.s32.totalorder %s89, 1
      %p632 = por %p630, %p631
      %p633 = scmp.ne.s32.totalorder %s624, %s625
      %p634 = scmp.eq.s32.totalorder %s89, 0
      %p635 = por %p633, %p634
      %p636 = scmp.ne.s32.totalorder %s624, %s625
      %p637 = scmp.eq.s32.totalorder %s90, 1
      %p638 = por %p636, %p637
      %p640 = scmp.ne.s32.totalorder %s625, %s639
      %p641 = scmp.eq.s32.totalorder %s90, 0
      %p642 = por %p640, %p641
      %s644 = sadd.s32 %s643, 1
      %p647 = scmp.eq.s32.totalorder %s84, 1
      %p648 = scmp.ne.s32.totalorder %s643, %s645
      %p649 = scmp.eq.s32.totalorder %s84, 0
      %p650 = por %p648, %p649
      %p651 = scmp.ne.s32.totalorder %s643, %s645
      %p652 = scmp.eq.s32.totalorder %s89, 1
      %p653 = por %p651, %p652
      %p654 = scmp.ne.s32.totalorder %s645, %s646
      %p655 = scmp.eq.s32.totalorder %s89, 0
      %p656 = por %p654, %p655
      %p657 = scmp.ne.s32.totalorder %s645, %s646
      %p658 = scmp.eq.s32.totalorder %s90, 1
      %p659 = por %p657, %p658
      %p661 = scmp.ne.s32.totalorder %s646, %s660
      %p662 = scmp.eq.s32.totalorder %s90, 0
      %p663 = por %p661, %p662
      %s665 = sadd.s32 %s664, 1
      %p668 = scmp.eq.s32.totalorder %s84, 1
      %p669 = scmp.ne.s32.totalorder %s664, %s666
      %p670 = scmp.eq.s32.totalorder %s84, 0
      %p671 = por %p669, %p670
      %p672 = scmp.ne.s32.totalorder %s664, %s666
      %p673 = scmp.eq.s32.totalorder %s89, 1
      %p674 = por %p672, %p673
      %p675 = scmp.ne.s32.totalorder %s666, %s667
      %p676 = scmp.eq.s32.totalorder %s89, 0
      %p677 = por %p675, %p676
      %p678 = scmp.ne.s32.totalorder %s666, %s667
      %p679 = scmp.eq.s32.totalorder %s90, 1
      %p680 = por %p678, %p679
      %p682 = scmp.ne.s32.totalorder %s667, %s681
      %p683 = scmp.eq.s32.totalorder %s90, 0
      %p684 = por %p682, %p683
      %s686 = sadd.s32 %s685, 1
      %p689 = scmp.eq.s32.totalorder %s84, 1
      %p690 = scmp.ne.s32.totalorder %s685, %s687
      %p691 = scmp.eq.s32.totalorder %s84, 0
      %p692 = por %p690, %p691
      %p693 = scmp.ne.s32.totalorder %s685, %s687
      %p694 = scmp.eq.s32.totalorder %s89, 1
      %p695 = por %p693, %p694
      %p696 = scmp.ne.s32.totalorder %s687, %s688
      %p697 = scmp.eq.s32.totalorder %s89, 0
      %p698 = por %p696, %p697
      %p699 = scmp.ne.s32.totalorder %s687, %s688
      %p700 = scmp.eq.s32.totalorder %s90, 1
      %p701 = por %p699, %p700
      %p703 = scmp.ne.s32.totalorder %s688, %s702
      %p704 = scmp.eq.s32.totalorder %s90, 0
      %p705 = por %p703, %p704
      %s707 = sadd.s32 %s706, 1
      %p710 = scmp.eq.s32.totalorder %s84, 1
      %p711 = scmp.ne.s32.totalorder %s706, %s708
      %p712 = scmp.eq.s32.totalorder %s84, 0
      %p713 = por %p711, %p712
      %p714 = scmp.ne.s32.totalorder %s706, %s708
      %p715 = scmp.eq.s32.totalorder %s89, 1
      %p716 = por %p714, %p715
      %p717 = scmp.ne.s32.totalorder %s708, %s709
      %p718 = scmp.eq.s32.totalorder %s89, 0
      %p719 = por %p717, %p718
      %p720 = scmp.ne.s32.totalorder %s708, %s709
      %p721 = scmp.eq.s32.totalorder %s90, 1
      %p722 = por %p720, %p721
      %p724 = scmp.ne.s32.totalorder %s709, %s723
      %p725 = scmp.eq.s32.totalorder %s90, 0
      %p726 = por %p724, %p725
      %s727 = ssub.s32 %s84, %s91
      %p728 = scmp.eq.s32.totalorder %s727, 0
      %s730 = sadd.s32 %s729, 1
      %s731 = scalar_select %p728, %s729, %s730
      %p734 = pneg %p728
      %p735 = scmp.eq.s32.totalorder %s84, 1
      %p736 = por %p734, %p735
      %p737 = scmp.ne.s32.totalorder %s729, %s732
      %p738 = scmp.eq.s32.totalorder %s84, 0
      %p739 = por %p737, %p738
      %p740 = scmp.ne.s32.totalorder %s729, %s732
      %p741 = scmp.eq.s32.totalorder %s89, 1
      %p742 = por %p740, %p741
      %p743 = scmp.ne.s32.totalorder %s732, %s733
      %p744 = scmp.eq.s32.totalorder %s89, 0
      %p745 = por %p743, %p744
      %p746 = scmp.ne.s32.totalorder %s732, %s733
      %p747 = scmp.eq.s32.totalorder %s90, 1
      %p748 = por %p746, %p747
      %p750 = scmp.ne.s32.totalorder %s733, %s749
      %p751 = scmp.eq.s32.totalorder %s90, 0
      %p752 = por %p750, %p751
      %p753 = scmp.le.s32.totalorder 1, %s84
      %p754 = scmp.lt.s32.totalorder %s84, 3
      %p755 = pnand %p753, %p754
      %p756 = pneg %p755
      // Predicated region
      $region9: #{tdnn_forward.1} parent=5 // pred_check
        _
      $region10: #{tdnn_forward.1} parent=5 // pred_check_branch
        %758 = sbr.rel (%p755) target = $region12
      $region11: #{tdnn_forward.1} parent=5 // pred_region
        %s759 = ssub.s32 %s84, 1
        // Predicated region
        $region13: #{tdnn_forward.1} parent=11 // pred_check
          %p760 = pneg %p131
        $region14: #{tdnn_forward.1} parent=11 // pred_check_branch
          %762 = sbr.rel (%p760) target = $region16
        $region15: #{tdnn_forward.1} parent=11 // pred_region
          _
        $region16: #{tdnn_forward.1} parent=11 // pred_fallthru
          _
        // Predicated region
        $region17: #{tdnn_forward.1} parent=11 // pred_check
          %p763 = pneg %p152
        $region18: #{tdnn_forward.1} parent=11 // pred_check_branch
          %765 = sbr.rel (%p763) target = $region20
        $region19: #{tdnn_forward.1} parent=11 // pred_region
          _
        $region20: #{tdnn_forward.1} parent=11 // pred_fallthru
          _
        // Predicated region
        $region21: #{tdnn_forward.1} parent=11 // pred_check
          %p766 = pneg %p173
        $region22: #{tdnn_forward.1} parent=11 // pred_check_branch
          %768 = sbr.rel (%p766) target = $region24
        $region23: #{tdnn_forward.1} parent=11 // pred_region
          %770 = vsyncadd [#allocation8], 0
          %s771 = sshll.u32 %s7, 4
          %s772 = int_to_ptr.hbm [resolvable:$true] %s771
          %s773 = sshll.u32 [#allocation7], 4
          %s774 = int_to_ptr.vmem [resolvable:$true] %s773
          %779 = dma.hbm_to_vmem [thread:$0]  %s772, 640, %s774, [#allocation8], 64, 64, 4
        $region24: #{tdnn_forward.1} parent=11 // pred_fallthru
          _
        // Predicated region
        $region25: #{tdnn_forward.1} parent=11 // pred_check
          %p780 = pneg %p194
        $region26: #{tdnn_forward.1} parent=11 // pred_check_branch
          %782 = sbr.rel (%p780) target = $region28
        $region27: #{tdnn_forward.1} parent=11 // pred_region
          _
        $region28: #{tdnn_forward.1} parent=11 // pred_fallthru
          _
        // Predicated region
        $region29: #{tdnn_forward.1} parent=11 // pred_check
          %p783 = pneg %p215
        $region30: #{tdnn_forward.1} parent=11 // pred_check_branch
          %785 = sbr.rel (%p783) target = $region32
        $region31: #{tdnn_forward.1} parent=11 // pred_region
          _
        $region32: #{tdnn_forward.1} parent=11 // pred_fallthru
          _
        // Predicated region
        $region33: #{tdnn_forward.1} parent=11 // pred_check
          %p786 = pneg %p236
        $region34: #{tdnn_forward.1} parent=11 // pred_check_branch
          %788 = sbr.rel (%p786) target = $region36
        $region35: #{tdnn_forward.1} parent=11 // pred_region
          %790 = vsyncadd [#allocation8], 0
          %s791 = sshll.u32 %s13, 4
          %s792 = int_to_ptr.hbm [resolvable:$true] %s791
          %s793 = sshll.u32 [#allocation9], 4
          %s794 = int_to_ptr.vmem [resolvable:$true] %s793
          %799 = dma.hbm_to_vmem [thread:$0]  %s792, 768, %s794, [#allocation8], 64, 64, 4
        $region36: #{tdnn_forward.1} parent=11 // pred_fallthru
          _
        // Predicated region
        $region37: #{tdnn_forward.1} parent=11 // pred_check
          %p800 = pneg %p257
        $region38: #{tdnn_forward.1} parent=11 // pred_check_branch
          %802 = sbr.rel (%p800) target = $region40
        $region39: #{tdnn_forward.1} parent=11 // pred_region
          %804 = vsyncadd [#allocation11], 0
          %s806 = sshll.u32 %s15, 4
          %s807 = int_to_ptr.hbm [resolvable:$true] %s806
          %s808 = sshll.u32 [#allocation10], 4
          %s809 = int_to_ptr.vmem [resolvable:$true] %s808
          %811 = dma.hbm_to_vmem [thread:$0]  %s807, 16, %s809, [#allocation11]
        $region40: #{tdnn_forward.1} parent=11 // pred_fallthru
          _
        // Predicated region
        $region41: #{tdnn_forward.1} parent=11 // pred_check
          %p812 = pneg %p278
        $region42: #{tdnn_forward.1} parent=11 // pred_check_branch
          %814 = sbr.rel (%p812) target = $region44
        $region43: #{tdnn_forward.1} parent=11 // pred_region
          %816 = vsyncadd [#allocation11], 0
          %s818 = sshll.u32 %s17, 4
          %s819 = int_to_ptr.hbm [resolvable:$true] %s818
          %s820 = sshll.u32 [#allocation12], 4
          %s821 = int_to_ptr.vmem [resolvable:$true] %s820
          %823 = dma.hbm_to_vmem [thread:$0]  %s819, 16, %s821, [#allocation11]
        $region44: #{tdnn_forward.1} parent=11 // pred_fallthru
          _
        // Predicated region
        $region45: #{tdnn_forward.1} parent=11 // pred_check
          %p824 = pneg %p299
        $region46: #{tdnn_forward.1} parent=11 // pred_check_branch
          %826 = sbr.rel (%p824) target = $region48
        $region47: #{tdnn_forward.1} parent=11 // pred_region
          %828 = vsyncadd [#allocation14], 0
          %s829 = sshll.u32 %s19, 4
          %s830 = int_to_ptr.hbm [resolvable:$true] %s829
          %s831 = sshll.u32 [#allocation13], 4
          %s832 = int_to_ptr.vmem [resolvable:$true] %s831
          %837 = dma.hbm_to_vmem [thread:$0]  %s830, 768, %s832, [#allocation14], 64, 64, 4
        $region48: #{tdnn_forward.1} parent=11 // pred_fallthru
          _
        // Predicated region
        $region49: #{tdnn_forward.1} parent=11 // pred_check
          %p838 = pneg %p320
        $region50: #{tdnn_forward.1} parent=11 // pred_check_branch
          %840 = sbr.rel (%p838) target = $region52
        $region51: #{tdnn_forward.1} parent=11 // pred_region
          %842 = vsyncadd [#allocation14], 0
          %s844 = sshll.u32 %s21, 4
          %s845 = int_to_ptr.hbm [resolvable:$true] %s844
          %s846 = sshll.u32 [#allocation15], 4
          %s847 = int_to_ptr.vmem [resolvable:$true] %s846
          %849 = dma.hbm_to_vmem [thread:$0]  %s845, 16, %s847, [#allocation14]
        $region52: #{tdnn_forward.1} parent=11 // pred_fallthru
          _
        // Predicated region
        $region53: #{tdnn_forward.1} parent=11 // pred_check
          %p850 = pneg %p341
        $region54: #{tdnn_forward.1} parent=11 // pred_check_branch
          %852 = sbr.rel (%p850) target = $region56
        $region55: #{tdnn_forward.1} parent=11 // pred_region
          %854 = vsyncadd [#allocation17], 0
          %s856 = sshll.u32 %s23, 4
          %s857 = int_to_ptr.hbm [resolvable:$true] %s856
          %s858 = sshll.u32 [#allocation16], 4
          %s859 = int_to_ptr.vmem [resolvable:$true] %s858
          %861 = dma.hbm_to_vmem [thread:$0]  %s857, 16, %s859, [#allocation17]
        $region56: #{tdnn_forward.1} parent=11 // pred_fallthru
          _
        // Predicated region
        $region57: #{tdnn_forward.1} parent=11 // pred_check
          %p862 = pneg %p362
        $region58: #{tdnn_forward.1} parent=11 // pred_check_branch
          %864 = sbr.rel (%p862) target = $region60
        $region59: #{tdnn_forward.1} parent=11 // pred_region
          _
        $region60: #{tdnn_forward.1} parent=11 // pred_fallthru
          _
        // Predicated region
        $region61: #{tdnn_forward.1} parent=11 // pred_check
          %p865 = pneg %p383
        $region62: #{tdnn_forward.1} parent=11 // pred_check_branch
          %867 = sbr.rel (%p865) target = $region64
        $region63: #{tdnn_forward.1} parent=11 // pred_region
          %869 = vsyncadd [#allocation17], 0
          %s871 = sshll.u32 %s27, 4
          %s872 = int_to_ptr.hbm [resolvable:$true] %s871
          %s873 = sshll.u32 [#allocation18], 4
          %s874 = int_to_ptr.vmem [resolvable:$true] %s873
          %876 = dma.hbm_to_vmem [thread:$0]  %s872, 16, %s874, [#allocation17]
        $region64: #{tdnn_forward.1} parent=11 // pred_fallthru
          _
        // Predicated region
        $region65: #{tdnn_forward.1} parent=11 // pred_check
          %p877 = pneg %p404
        $region66: #{tdnn_forward.1} parent=11 // pred_check_branch
          %879 = sbr.rel (%p877) target = $region68
        $region67: #{tdnn_forward.1} parent=11 // pred_region
          %881 = vsyncadd [#allocation20], 0
          %s883 = sshll.u32 %s29, 4
          %s884 = int_to_ptr.hbm [resolvable:$true] %s883
          %s885 = sshll.u32 [#allocation19], 4
          %s886 = int_to_ptr.vmem [resolvable:$true] %s885
          %888 = dma.hbm_to_vmem [thread:$0]  %s884, 16, %s886, [#allocation20]
        $region68: #{tdnn_forward.1} parent=11 // pred_fallthru
          _
        // Predicated region
        $region69: #{tdnn_forward.1} parent=11 // pred_check
          %p889 = pneg %p425
        $region70: #{tdnn_forward.1} parent=11 // pred_check_branch
          %891 = sbr.rel (%p889) target = $region72
        $region71: #{tdnn_forward.1} parent=11 // pred_region
          _
        $region72: #{tdnn_forward.1} parent=11 // pred_fallthru
          _
        // Predicated region
        $region73: #{tdnn_forward.1} parent=11 // pred_check
          %p892 = pneg %p446
        $region74: #{tdnn_forward.1} parent=11 // pred_check_branch
          %894 = sbr.rel (%p892) target = $region76
        $region75: #{tdnn_forward.1} parent=11 // pred_region
          _
        $region76: #{tdnn_forward.1} parent=11 // pred_fallthru
          _
        // Predicated region
        $region77: #{tdnn_forward.1} parent=11 // pred_check
          %p895 = pneg %p467
        $region78: #{tdnn_forward.1} parent=11 // pred_check_branch
          %897 = sbr.rel (%p895) target = $region80
        $region79: #{tdnn_forward.1} parent=11 // pred_region
          _
        $region80: #{tdnn_forward.1} parent=11 // pred_fallthru
          _
        // Predicated region
        $region81: #{tdnn_forward.1} parent=11 // pred_check
          %p898 = pneg %p488
        $region82: #{tdnn_forward.1} parent=11 // pred_check_branch
          %900 = sbr.rel (%p898) target = $region84
        $region83: #{tdnn_forward.1} parent=11 // pred_region
          %902 = vsyncadd [#allocation20], 0
          %s904 = sshll.u32 %s37, 4
          %s905 = int_to_ptr.hbm [resolvable:$true] %s904
          %s906 = sshll.u32 [#allocation21], 4
          %s907 = int_to_ptr.vmem [resolvable:$true] %s906
          %909 = dma.hbm_to_vmem [thread:$0]  %s905, 16, %s907, [#allocation20]
        $region84: #{tdnn_forward.1} parent=11 // pred_fallthru
          _
        // Predicated region
        $region85: #{tdnn_forward.1} parent=11 // pred_check
          %p910 = pneg %p509
        $region86: #{tdnn_forward.1} parent=11 // pred_check_branch
          %912 = sbr.rel (%p910) target = $region88
        $region87: #{tdnn_forward.1} parent=11 // pred_region
          _
        $region88: #{tdnn_forward.1} parent=11 // pred_fallthru
          _
        // Predicated region
        $region89: #{tdnn_forward.1} parent=11 // pred_check
          %p913 = pneg %p530
        $region90: #{tdnn_forward.1} parent=11 // pred_check_branch
          %915 = sbr.rel (%p913) target = $region92
        $region91: #{tdnn_forward.1} parent=11 // pred_region
          %917 = vsyncadd [#allocation23], 0
          %s918 = sshll.u32 %s41, 4
          %s919 = int_to_ptr.hbm [resolvable:$true] %s918
          %s920 = sshll.u32 [#allocation22], 4
          %s921 = int_to_ptr.vmem [resolvable:$true] %s920
          %926 = dma.hbm_to_vmem [thread:$0]  %s919, 256, %s921, [#allocation23], 64, 64, 4
        $region92: #{tdnn_forward.1} parent=11 // pred_fallthru
          _
        // Predicated region
        $region93: #{tdnn_forward.1} parent=11 // pred_check
          %p927 = pneg %p551
        $region94: #{tdnn_forward.1} parent=11 // pred_check_branch
          %929 = sbr.rel (%p927) target = $region96
        $region95: #{tdnn_forward.1} parent=11 // pred_region
          %931 = vsyncadd [#allocation23], 0
          %s932 = sshll.u32 %s43, 4
          %s933 = int_to_ptr.hbm [resolvable:$true] %s932
          %s934 = sshll.u32 [#allocation24], 4
          %s935 = int_to_ptr.vmem [resolvable:$true] %s934
          %940 = dma.hbm_to_vmem [thread:$0]  %s933, 256, %s935, [#allocation23], 64, 64, 4
        $region96: #{tdnn_forward.1} parent=11 // pred_fallthru
          _
        // Predicated region
        $region97: #{tdnn_forward.1} parent=11 // pred_check
          %p941 = pneg %p572
        $region98: #{tdnn_forward.1} parent=11 // pred_check_branch
          %943 = sbr.rel (%p941) target = $region100
        $region99: #{tdnn_forward.1} parent=11 // pred_region
          _
        $region100: #{tdnn_forward.1} parent=11 // pred_fallthru
          _
        // Predicated region
        $region101: #{tdnn_forward.1} parent=11 // pred_check
          %p944 = pneg %p593
        $region102: #{tdnn_forward.1} parent=11 // pred_check_branch
          %946 = sbr.rel (%p944) target = $region104
        $region103: #{tdnn_forward.1} parent=11 // pred_region
          _
        $region104: #{tdnn_forward.1} parent=11 // pred_fallthru
          _
        // Predicated region
        $region105: #{tdnn_forward.1} parent=11 // pred_check
          %p947 = pneg %p614
        $region106: #{tdnn_forward.1} parent=11 // pred_check_branch
          %949 = sbr.rel (%p947) target = $region108
        $region107: #{tdnn_forward.1} parent=11 // pred_region
          %951 = vsyncadd [#allocation26], 0
          %s952 = sshll.u32 %s49, 4
          %s953 = int_to_ptr.hbm [resolvable:$true] %s952
          %s954 = sshll.u32 [#allocation25], 4
          %s955 = int_to_ptr.vmem [resolvable:$true] %s954
          %960 = dma.hbm_to_vmem [thread:$0]  %s953, 256, %s955, [#allocation26], 64, 64, 4
        $region108: #{tdnn_forward.1} parent=11 // pred_fallthru
          _
        // Predicated region
        $region109: #{tdnn_forward.1} parent=11 // pred_check
          %p961 = pneg %p635
        $region110: #{tdnn_forward.1} parent=11 // pred_check_branch
          %963 = sbr.rel (%p961) target = $region112
        $region111: #{tdnn_forward.1} parent=11 // pred_region
          %965 = vsyncadd [#allocation26], 0
          %s967 = sshll.u32 %s51, 4
          %s968 = int_to_ptr.hbm [resolvable:$true] %s967
          %s969 = sshll.u32 [#allocation27], 4
          %s970 = int_to_ptr.vmem [resolvable:$true] %s969
          %972 = dma.hbm_to_vmem [thread:$0]  %s968, 16, %s970, [#allocation26]
        $region112: #{tdnn_forward.1} parent=11 // pred_fallthru
          _
        // Predicated region
        $region113: #{tdnn_forward.1} parent=11 // pred_check
          %p973 = pneg %p656
        $region114: #{tdnn_forward.1} parent=11 // pred_check_branch
          %975 = sbr.rel (%p973) target = $region116
        $region115: #{tdnn_forward.1} parent=11 // pred_region
          %977 = vsyncadd [#allocation29], 0
          %s979 = sshll.u32 %s53, 4
          %s980 = int_to_ptr.hbm [resolvable:$true] %s979
          %s981 = sshll.u32 [#allocation28], 4
          %s982 = int_to_ptr.vmem [resolvable:$true] %s981
          %984 = dma.hbm_to_vmem [thread:$0]  %s980, 16, %s982, [#allocation29]
        $region116: #{tdnn_forward.1} parent=11 // pred_fallthru
          _
        // Predicated region
        $region117: #{tdnn_forward.1} parent=11 // pred_check
          %p985 = pneg %p677
        $region118: #{tdnn_forward.1} parent=11 // pred_check_branch
          %987 = sbr.rel (%p985) target = $region120
        $region119: #{tdnn_forward.1} parent=11 // pred_region
          _
        $region120: #{tdnn_forward.1} parent=11 // pred_fallthru
          _
        // Predicated region
        $region121: #{tdnn_forward.1} parent=11 // pred_check
          %p988 = pneg %p698
        $region122: #{tdnn_forward.1} parent=11 // pred_check_branch
          %990 = sbr.rel (%p988) target = $region124
        $region123: #{tdnn_forward.1} parent=11 // pred_region
          %992 = vsyncadd [#allocation29], 0
          %s994 = sshll.u32 %s57, 4
          %s995 = int_to_ptr.hbm [resolvable:$true] %s994
          %s996 = sshll.u32 [#allocation30], 4
          %s997 = int_to_ptr.vmem [resolvable:$true] %s996
          %999 = dma.hbm_to_vmem [thread:$0]  %s995, 16, %s997, [#allocation29]
        $region124: #{tdnn_forward.1} parent=11 // pred_fallthru
          _
        // Predicated region
        $region125: #{tdnn_forward.1} parent=11 // pred_check
          %p1000 = pneg %p719
        $region126: #{tdnn_forward.1} parent=11 // pred_check_branch
          %1002 = sbr.rel (%p1000) target = $region128
        $region127: #{tdnn_forward.1} parent=11 // pred_region
          %1004 = vsyncadd [#allocation32], 0
          %s1006 = sshll.u32 %s59, 4
          %s1007 = int_to_ptr.hbm [resolvable:$true] %s1006
          %s1008 = sshll.u32 [#allocation31], 4
          %s1009 = int_to_ptr.vmem [resolvable:$true] %s1008
          %1011 = dma.hbm_to_vmem [thread:$0]  %s1007, 16, %s1009, [#allocation32]
        $region128: #{tdnn_forward.1} parent=11 // pred_fallthru
          _
      $region12: #{tdnn_forward.1} parent=5 // pred_fallthru
        _
      %p1012 = scmp.lt.s32.totalorder %s84, 2
      // Predicated region
      $region129: #{tdnn_forward.1} parent=5 // pred_check
        %p1013 = pneg %p1012
      $region130: #{tdnn_forward.1} parent=5 // pred_check_branch
        %1015 = sbr.rel (%p1013) target = $region132
      $region131: #{tdnn_forward.1} parent=5 // pred_region
        // Predicated region
        $region133: #{tdnn_forward.1} parent=131 // pred_check
          %p1016 = pneg %p104
        $region134: #{tdnn_forward.1} parent=131 // pred_check_branch
          %1018 = sbr.rel (%p1016) target = $region136
        $region135: #{tdnn_forward.1} parent=131 // pred_region
          %s1019 = sand.u32 %s94, 1
          %s1020 = scalar_lea.sflag [#allocation5], %s1019
          %s1021 = sand.u32 %s94, 1
          %s1022 = smul.addr %s1021, 16
          %s1023 = scalar_lea.vmem [#allocation4], %s1022
          %1025 = vsyncadd %s1020, 0
          %s1026 = smul.addr %s84, 2
          %s1027 = smul.addr %s1026, 8
          %s1028 = scalar_lea.hbm %s1, %s1027
          %s1029 = sshll.u32 %s1028, 4
          %s1030 = int_to_ptr.hbm [resolvable:$true] %s1029
          %s1031 = sshll.u32 %s1023, 4
          %s1032 = int_to_ptr.vmem [resolvable:$true] %s1031
          %1037 = dma.hbm_to_vmem [thread:$0]  %s1030, 256, %s1032, %s1020, 128, 128, 8
        $region136: #{tdnn_forward.1} parent=131 // pred_fallthru
          _
      $region132: #{tdnn_forward.1} parent=5 // pred_fallthru
        _
      %p1038 = scmp.le.s32.totalorder 1, %s84
      %p1039 = scmp.lt.s32.totalorder %s84, 3
      %p1040 = pnand %p1038, %p1039
      %p1041 = pneg %p1040
      // Predicated region
      $region137: #{tdnn_forward.1} parent=5 // pred_check
        _
      $region138: #{tdnn_forward.1} parent=5 // pred_check_branch
        %1043 = sbr.rel (%p1040) target = $region140
      $region139: #{tdnn_forward.1} parent=5 // pred_region
        %s1044 = ssub.s32 %s84, 1
        %s1045 = sand.u32 %s97, 1
        %s1046 = scalar_lea.sflag [#allocation5], %s1045
        %s1047 = sand.u32 %s97, 1
        %s1048 = smul.addr %s1047, 16
        %s1049 = scalar_lea.vmem [#allocation4], %s1048
        // Predicated region
        $region141: #{tdnn_forward.1} parent=139 // pred_check
          %p1050 = pneg %p110
        $region142: #{tdnn_forward.1} parent=139 // pred_check_branch
          %1052 = sbr.rel (%p1050) target = $region144
        $region143: #{tdnn_forward.1} parent=139 // pred_region
          %1054 = dma.done %s1046, 256
        $region144: #{tdnn_forward.1} parent=139 // pred_fallthru
          _
        // Predicated region
        $region145: #{tdnn_forward.1} parent=139 // pred_check
          %p1055 = pneg %p173
        $region146: #{tdnn_forward.1} parent=139 // pred_check_branch
          %1057 = sbr.rel (%p1055) target = $region148
        $region147: #{tdnn_forward.1} parent=139 // pred_region
          %1059 = dma.done [#allocation8], 640
        $region148: #{tdnn_forward.1} parent=139 // pred_fallthru
          _
        // Predicated region
        $region149: #{tdnn_forward.1} parent=139 // pred_check
          %p1060 = pneg %p236
        $region150: #{tdnn_forward.1} parent=139 // pred_check_branch
          %1062 = sbr.rel (%p1060) target = $region152
        $region151: #{tdnn_forward.1} parent=139 // pred_region
          %1064 = dma.done [#allocation8], 768
        $region152: #{tdnn_forward.1} parent=139 // pred_fallthru
          _
        // Predicated region
        $region153: #{tdnn_forward.1} parent=139 // pred_check
          %p1065 = pneg %p257
        $region154: #{tdnn_forward.1} parent=139 // pred_check_branch
          %1067 = sbr.rel (%p1065) target = $region156
        $region155: #{tdnn_forward.1} parent=139 // pred_region
          %1069 = dma.done [#allocation11], 16
        $region156: #{tdnn_forward.1} parent=139 // pred_fallthru
          _
        // Predicated region
        $region157: #{tdnn_forward.1} parent=139 // pred_check
          %p1070 = pneg %p278
        $region158: #{tdnn_forward.1} parent=139 // pred_check_branch
          %1072 = sbr.rel (%p1070) target = $region160
        $region159: #{tdnn_forward.1} parent=139 // pred_region
          %1074 = dma.done [#allocation11], 16
        $region160: #{tdnn_forward.1} parent=139 // pred_fallthru
          _
        // Predicated region
        $region161: #{tdnn_forward.1} parent=139 // pred_check
          %p1075 = pneg %p299
        $region162: #{tdnn_forward.1} parent=139 // pred_check_branch
          %1077 = sbr.rel (%p1075) target = $region164
        $region163: #{tdnn_forward.1} parent=139 // pred_region
          %1079 = dma.done [#allocation14], 768
        $region164: #{tdnn_forward.1} parent=139 // pred_fallthru
          _
        // Predicated region
        $region165: #{tdnn_forward.1} parent=139 // pred_check
          %p1080 = pneg %p320
        $region166: #{tdnn_forward.1} parent=139 // pred_check_branch
          %1082 = sbr.rel (%p1080) target = $region168
        $region167: #{tdnn_forward.1} parent=139 // pred_region
          %1084 = dma.done [#allocation14], 16
        $region168: #{tdnn_forward.1} parent=139 // pred_fallthru
          _
        // Predicated region
        $region169: #{tdnn_forward.1} parent=139 // pred_check
          %p1085 = pneg %p341
        $region170: #{tdnn_forward.1} parent=139 // pred_check_branch
          %1087 = sbr.rel (%p1085) target = $region172
        $region171: #{tdnn_forward.1} parent=139 // pred_region
          %1089 = dma.done [#allocation17], 16
        $region172: #{tdnn_forward.1} parent=139 // pred_fallthru
          _
        // Predicated region
        $region173: #{tdnn_forward.1} parent=139 // pred_check
          %p1090 = pneg %p383
        $region174: #{tdnn_forward.1} parent=139 // pred_check_branch
          %1092 = sbr.rel (%p1090) target = $region176
        $region175: #{tdnn_forward.1} parent=139 // pred_region
          %1094 = dma.done [#allocation17], 16
        $region176: #{tdnn_forward.1} parent=139 // pred_fallthru
          _
        // Predicated region
        $region177: #{tdnn_forward.1} parent=139 // pred_check
          %p1095 = pneg %p404
        $region178: #{tdnn_forward.1} parent=139 // pred_check_branch
          %1097 = sbr.rel (%p1095) target = $region180
        $region179: #{tdnn_forward.1} parent=139 // pred_region
          %1099 = dma.done [#allocation20], 16
        $region180: #{tdnn_forward.1} parent=139 // pred_fallthru
          _
        // Predicated region
        $region181: #{tdnn_forward.1} parent=139 // pred_check
          %p1100 = pneg %p488
        $region182: #{tdnn_forward.1} parent=139 // pred_check_branch
          %1102 = sbr.rel (%p1100) target = $region184
        $region183: #{tdnn_forward.1} parent=139 // pred_region
          %1104 = dma.done [#allocation20], 16
        $region184: #{tdnn_forward.1} parent=139 // pred_fallthru
          _
        // Predicated region
        $region185: #{tdnn_forward.1} parent=139 // pred_check
          %p1105 = pneg %p530
        $region186: #{tdnn_forward.1} parent=139 // pred_check_branch
          %1107 = sbr.rel (%p1105) target = $region188
        $region187: #{tdnn_forward.1} parent=139 // pred_region
          %1109 = dma.done [#allocation23], 256
        $region188: #{tdnn_forward.1} parent=139 // pred_fallthru
          _
        // Predicated region
        $region189: #{tdnn_forward.1} parent=139 // pred_check
          %p1110 = pneg %p551
        $region190: #{tdnn_forward.1} parent=139 // pred_check_branch
          %1112 = sbr.rel (%p1110) target = $region192
        $region191: #{tdnn_forward.1} parent=139 // pred_region
          %1114 = dma.done [#allocation23], 256
        $region192: #{tdnn_forward.1} parent=139 // pred_fallthru
          _
        // Predicated region
        $region193: #{tdnn_forward.1} parent=139 // pred_check
          %p1115 = pneg %p614
        $region194: #{tdnn_forward.1} parent=139 // pred_check_branch
          %1117 = sbr.rel (%p1115) target = $region196
        $region195: #{tdnn_forward.1} parent=139 // pred_region
          %1119 = dma.done [#allocation26], 256
        $region196: #{tdnn_forward.1} parent=139 // pred_fallthru
          _
        // Predicated region
        $region197: #{tdnn_forward.1} parent=139 // pred_check
          %p1120 = pneg %p635
        $region198: #{tdnn_forward.1} parent=139 // pred_check_branch
          %1122 = sbr.rel (%p1120) target = $region200
        $region199: #{tdnn_forward.1} parent=139 // pred_region
          %1124 = dma.done [#allocation26], 16
        $region200: #{tdnn_forward.1} parent=139 // pred_fallthru
          _
        // Predicated region
        $region201: #{tdnn_forward.1} parent=139 // pred_check
          %p1125 = pneg %p656
        $region202: #{tdnn_forward.1} parent=139 // pred_check_branch
          %1127 = sbr.rel (%p1125) target = $region204
        $region203: #{tdnn_forward.1} parent=139 // pred_region
          %1129 = dma.done [#allocation29], 16
        $region204: #{tdnn_forward.1} parent=139 // pred_fallthru
          _
        // Predicated region
        $region205: #{tdnn_forward.1} parent=139 // pred_check
          %p1130 = pneg %p698
        $region206: #{tdnn_forward.1} parent=139 // pred_check_branch
          %1132 = sbr.rel (%p1130) target = $region208
        $region207: #{tdnn_forward.1} parent=139 // pred_region
          %1134 = dma.done [#allocation29], 16
        $region208: #{tdnn_forward.1} parent=139 // pred_fallthru
          _
        // Predicated region
        $region209: #{tdnn_forward.1} parent=139 // pred_check
          %p1135 = pneg %p719
        $region210: #{tdnn_forward.1} parent=139 // pred_check_branch
          %1137 = sbr.rel (%p1135) target = $region212
        $region211: #{tdnn_forward.1} parent=139 // pred_region
          %1139 = dma.done [#allocation32], 16
        $region212: #{tdnn_forward.1} parent=139 // pred_fallthru
          _
        %s1140 = sand.u32 %s97, 1
        %s1141 = scalar_lea.sflag [#allocation5], %s1140
        %s1142 = sand.u32 %s97, 1
        %s1143 = smul.addr %s1142, 16
        %s1144 = scalar_lea.vmem [#allocation4], %s1143
        %p1145 = pneg %p110
        %p1146 = pneg %p107
        %p1147 = pneg %p131
        %p1148 = pneg %p128
        %p1149 = pneg %p152
        %p1150 = pneg %p149
        %p1151 = pneg %p173
        %p1152 = pneg %p170
        %p1153 = pneg %p194
        %p1154 = pneg %p191
        %p1155 = pneg %p215
        %p1156 = pneg %p212
        %p1157 = pneg %p236
        %p1158 = pneg %p233
        %p1159 = pneg %p257
        %p1160 = pneg %p254
        %p1161 = pneg %p278
        %p1162 = pneg %p275
        %p1163 = pneg %p299
        %p1164 = pneg %p296
        %p1165 = pneg %p320
        %p1166 = pneg %p317
        %p1167 = pneg %p341
        %p1168 = pneg %p338
        %p1169 = pneg %p362
        %p1170 = pneg %p359
        %p1171 = pneg %p383
        %p1172 = pneg %p380
        %p1173 = pneg %p404
        %p1174 = pneg %p401
        %p1175 = pneg %p425
        %p1176 = pneg %p422
        %p1177 = pneg %p446
        %p1178 = pneg %p443
        %p1179 = pneg %p467
        %p1180 = pneg %p464
        %p1181 = pneg %p488
        %p1182 = pneg %p485
        %p1183 = pneg %p509
        %p1184 = pneg %p506
        %p1185 = pneg %p530
        %p1186 = pneg %p527
        %p1187 = pneg %p551
        %p1188 = pneg %p548
        %p1189 = pneg %p572
        %p1190 = pneg %p569
        %p1191 = pneg %p593
        %p1192 = pneg %p590
        %p1193 = pneg %p614
        %p1194 = pneg %p611
        %p1195 = pneg %p635
        %p1196 = pneg %p632
        %p1197 = pneg %p656
        %p1198 = pneg %p653
        %p1199 = pneg %p677
        %p1200 = pneg %p674
        %p1201 = pneg %p698
        %p1202 = pneg %p695
        %p1203 = pneg %p719
        %p1204 = pneg %p716
        %p1205 = pneg %p745
        %p1206 = pneg %p742
        %s1207 = sand.u32 %s732, 1
        %s1208 = scalar_lea.sflag [#allocation6], %s1207
        %s1209 = sand.u32 %s732, 1
        %s1210 = scalar_lea.vmem [#allocation33], %s1209
        %v1212 = vld [vmem:[%s1049] sm:$0xff]
        %v1213 = vld [vmem:[%s1049 + $0x8] sm:$0xff]
        %v1214 = vld [vmem:[%s3] sm:$0x1]
        %v1216 = vperm.slane %v1214, 0
        %v1218 = vmul.f32 %v1212, %v1216
        %v1219 = vmul.f32 %v1213, %v1216
        %v1220 = vld [vmem:[%s5] sm:$0x1]
        %v1222 = vperm.slane %v1220, 0
        %v1224 = vadd.f32 %v1218, %v1222
        %v1225 = vadd.f32 %v1219, %v1222
        %vm1226 = vcmask 130048
        %1227 = vst.msk [vmem:[#allocation2] sm:$0xff] %vm1226, %v1224
        %1228 = vst.msk [vmem:[#allocation2 + $0x8] sm:$0xff] %vm1226, %v1225
        %v1229 = vld [vmem:[#allocation2] sm:$0xff]
        %v1230 = vld [vmem:[#allocation2 + $0x8] sm:$0xf]
        %v1231 = vpack.c.bf16 %v1230, %v1229
        %v1232 = vld [vmem:[#allocation7] sm:$0xf]
        %v1233 = vld [vmem:[#allocation7 + $0x4] sm:$0xf]
        %v1234 = vld [vmem:[#allocation2 + $0x1] sm:$0xff]
        %v1235 = vld [vmem:[#allocation2 + $0x9] sm:$0xf]
        %v1236 = vpack.c.bf16 %v1235, %v1234
        %s1237 = scalar_lea.vmem [#allocation7], 8
        %v1238 = vld [vmem:[%s1237] sm:$0xf]
        %v1239 = vld [vmem:[%s1237 + $0x4] sm:$0xf]
        %v1242 = vunpack.c.l.b16 %v1238
        %v1243 = vunpack.c.l.b16 %v1239
        %v1244 = vpack.c.b16 %v1243, %v1242
        %v1247 = vsel %vm1226, %v1236, 0
        %1249 = vmatpush.bf16.msra.mxu0 0
        %1250 = vmatpush.bf16.msra.mxu0 0
        %1251 = vmatpush.bf16.msra.mxu0 0
        %1252 = vmatpush.bf16.msra.mxu0 0
        %1253 = vmatpush.bf16.msra.mxu0 0
        %1254 = vmatpush.bf16.msra.mxu0 0
        %1255 = vmatpush.bf16.msra.mxu0 0
        %1256 = vmatpush.bf16.msra.mxu0 %v1244
        %1257 = vmatmul.bf16.gmra.mxu0 %v1247
        %v1258 = vpop.f32.mrf.mxu0
        %v1259 = vadd.f32 0.0, %v1258
        %v1260 = vpop.f32.mrf.mxu0
        %v1261 = vadd.f32 0.0, %v1260
        %1262 = vdwg.mxu0
        %v1265 = vunpack.c.l.b16 %v1232
        %v1266 = vunpack.c.l.b16 %v1233
        %v1267 = vpack.c.b16 %v1266, %v1265
        %v1270 = vsel %vm1226, %v1231, 0
        %1272 = vmatpush.bf16.msra.mxu0 0
        %1273 = vmatpush.bf16.msra.mxu0 0
        %1274 = vmatpush.bf16.msra.mxu0 0
        %1275 = vmatpush.bf16.msra.mxu0 0
        %1276 = vmatpush.bf16.msra.mxu0 0
        %1277 = vmatpush.bf16.msra.mxu0 0
        %1278 = vmatpush.bf16.msra.mxu0 0
        %1279 = vmatpush.bf16.msra.mxu0 %v1267
        %1280 = vmatmul.bf16.gmra.mxu0 %v1270
        %v1281 = vpop.f32.mrf.mxu0
        %v1282 = vadd.f32 %v1259, %v1281
        %v1283 = vpop.f32.mrf.mxu0
        %v1284 = vadd.f32 %v1261, %v1283
        %1285 = vdwg.mxu0
        %v1286 = vld [vmem:[#allocation2 + $0x2] sm:$0xff]
        %v1287 = vld [vmem:[#allocation2 + $0xa] sm:$0xf]
        %v1288 = vpack.c.bf16 %v1287, %v1286
        %s1289 = scalar_lea.vmem [#allocation7], 16
        %v1290 = vld [vmem:[%s1289] sm:$0xf]
        %v1291 = vld [vmem:[%s1289 + $0x4] sm:$0xf]
        %v1294 = vunpack.c.l.b16 %v1290
        %v1295 = vunpack.c.l.b16 %v1291
        %v1296 = vpack.c.b16 %v1295, %v1294
        %v1299 = vsel %vm1226, %v1288, 0
        %1301 = vmatpush.bf16.msra.mxu0 0
        %1302 = vmatpush.bf16.msra.mxu0 0
        %1303 = vmatpush.bf16.msra.mxu0 0
        %1304 = vmatpush.bf16.msra.mxu0 0
        %1305 = vmatpush.bf16.msra.mxu0 0
        %1306 = vmatpush.bf16.msra.mxu0 0
        %1307 = vmatpush.bf16.msra.mxu0 0
        %1308 = vmatpush.bf16.msra.mxu0 %v1296
        %1309 = vmatmul.bf16.gmra.mxu0 %v1299
        %v1310 = vpop.f32.mrf.mxu0
        %v1311 = vadd.f32 0.0, %v1310
        %v1312 = vpop.f32.mrf.mxu0
        %v1313 = vadd.f32 0.0, %v1312
        %1314 = vdwg.mxu0
        %v1315 = vadd.f32 %v1282, %v1311
        %v1316 = vadd.f32 %v1284, %v1313
        %v1317 = vld [vmem:[#allocation2 + $0x3] sm:$0xff]
        %v1318 = vld [vmem:[#allocation2 + $0xb] sm:$0xf]
        %v1319 = vpack.c.bf16 %v1318, %v1317
        %s1320 = scalar_lea.vmem [#allocation7], 24
        %v1321 = vld [vmem:[%s1320] sm:$0xf]
        %v1322 = vld [vmem:[%s1320 + $0x4] sm:$0xf]
        %v1325 = vunpack.c.l.b16 %v1321
        %v1326 = vunpack.c.l.b16 %v1322
        %v1327 = vpack.c.b16 %v1326, %v1325
        %v1330 = vsel %vm1226, %v1319, 0
        %1332 = vmatpush.bf16.msra.mxu0 0
        %1333 = vmatpush.bf16.msra.mxu0 0
        %1334 = vmatpush.bf16.msra.mxu0 0
        %1335 = vmatpush.bf16.msra.mxu0 0
        %1336 = vmatpush.bf16.msra.mxu0 0
        %1337 = vmatpush.bf16.msra.mxu0 0
        %1338 = vmatpush.bf16.msra.mxu0 0
        %1339 = vmatpush.bf16.msra.mxu0 %v1327
        %1340 = vmatmul.bf16.gmra.mxu0 %v1330
        %v1341 = vpop.f32.mrf.mxu0
        %v1342 = vadd.f32 0.0, %v1341
        %v1343 = vpop.f32.mrf.mxu0
        %v1344 = vadd.f32 0.0, %v1343
        %1345 = vdwg.mxu0
        %v1346 = vadd.f32 %v1315, %v1342
        %v1347 = vadd.f32 %v1316, %v1344
        %v1348 = vld [vmem:[#allocation2 + $0x4] sm:$0xff]
        %v1349 = vld [vmem:[#allocation2 + $0xc] sm:$0xf]
        %v1350 = vpack.c.bf16 %v1349, %v1348
        %s1351 = scalar_lea.vmem [#allocation7], 32
        %v1352 = vld [vmem:[%s1351] sm:$0xf]
        %v1353 = vld [vmem:[%s1351 + $0x4] sm:$0xf]
        %v1356 = vunpack.c.l.b16 %v1352
        %v1357 = vunpack.c.l.b16 %v1353
        %v1358 = vpack.c.b16 %v1357, %v1356
        %v1361 = vsel %vm1226, %v1350, 0
        %1363 = vmatpush.bf16.msra.mxu0 0
        %1364 = vmatpush.bf16.msra.mxu0 0
        %1365 = vmatpush.bf16.msra.mxu0 0
        %1366 = vmatpush.bf16.msra.mxu0 0
        %1367 = vmatpush.bf16.msra.mxu0 0
        %1368 = vmatpush.bf16.msra.mxu0 0
        %1369 = vmatpush.bf16.msra.mxu0 0
        %1370 = vmatpush.bf16.msra.mxu0 %v1358
        %1371 = vmatmul.bf16.gmra.mxu0 %v1361
        %v1372 = vpop.f32.mrf.mxu0
        %v1373 = vadd.f32 0.0, %v1372
        %v1374 = vpop.f32.mrf.mxu0
        %v1375 = vadd.f32 0.0, %v1374
        %1376 = vdwg.mxu0
        %v1377 = vadd.f32 %v1346, %v1373
        %v1378 = vadd.f32 %v1347, %v1375
        %v1379 = vld [vmem:[%s9] sm:$0x1]
        %v1381 = vperm.slane %v1379, 0
        %v1383 = vmul.f32 %v1377, %v1381
        %v1384 = vmul.f32 %v1378, %v1381
        %v1385 = vld [vmem:[%s11] sm:$0x1]
        %v1387 = vperm.slane %v1385, 0
        %v1389 = vadd.f32 %v1383, %v1387
        %v1390 = vadd.f32 %v1384, %v1387
        %v1391 = vmax.f32 %v1389, 0.0
        %v1392 = vmax.f32 %v1390, 0.0
        %vm1393 = vcmask 261120
        %1394 = vst.msk [vmem:[#allocation2] sm:$0xff] %vm1393, %v1391
        %vm1395 = vcmask 257024
        %1396 = vst.msk [vmem:[#allocation2 + $0x8] sm:$0xf] %vm1395, %v1392
        %v1397 = vld [vmem:[#allocation2] sm:$0xff]
        %v1398 = vld [vmem:[#allocation2 + $0x8] sm:$0x3]
        %v1399 = vpack.c.bf16 %v1398, %v1397
        %v1400 = vld [vmem:[#allocation9] sm:$0xf]
        %v1401 = vld [vmem:[#allocation9 + $0x4] sm:$0xf]
        %v1402 = vld [vmem:[#allocation9 + $0x8] sm:$0xf]
        %v1403 = vld [vmem:[#allocation9 + $0xc] sm:$0xf]
        %v1404 = vld [vmem:[#allocation2 + $0x1] sm:$0xff]
        %v1405 = vld [vmem:[#allocation2 + $0x9] sm:$0x3]
        %v1406 = vpack.c.bf16 %v1405, %v1404
        %s1407 = scalar_lea.vmem [#allocation9], 16
        %v1408 = vld [vmem:[%s1407] sm:$0xf]
        %v1409 = vld [vmem:[%s1407 + $0x4] sm:$0xf]
        %v1410 = vld [vmem:[%s1407 + $0x8] sm:$0xf]
        %v1411 = vld [vmem:[%s1407 + $0xc] sm:$0xf]
        %v1416 = vunpack.c.l.b16 %v1408
        %v1417 = vunpack.c.l.b16 %v1409
        %v1418 = vunpack.c.l.b16 %v1410
        %v1419 = vunpack.c.l.b16 %v1411
        %v1420 = vpack.c.b16 %v1417, %v1416
        %v1421 = vpack.c.b16 %v1419, %v1418
        %v1425 = vsel %vm1393, %v1406, 0
        %1427 = vmatpush.bf16.msra.mxu0 0
        %1428 = vmatpush.bf16.msra.mxu0 0
        %1429 = vmatpush.bf16.msra.mxu0 0
        %1430 = vmatpush.bf16.msra.mxu0 0
        %1431 = vmatpush.bf16.msra.mxu0 0
        %1432 = vmatpush.bf16.msra.mxu0 0
        %1433 = vmatpush.bf16.msra.mxu0 %v1421
        %1434 = vmatpush.bf16.msra.mxu0 %v1420
        %1435 = vmatmul.bf16.gmra.mxu0 %v1425
        %v1436 = vpop.f32.mrf.mxu0
        %v1437 = vadd.f32 0.0, %v1436
        %v1438 = vpop.f32.mrf.mxu0
        %v1439 = vadd.f32 0.0, %v1438
        %1440 = vdwg.mxu0
        %v1445 = vunpack.c.l.b16 %v1400
        %v1446 = vunpack.c.l.b16 %v1401
        %v1447 = vunpack.c.l.b16 %v1402
        %v1448 = vunpack.c.l.b16 %v1403
        %v1449 = vpack.c.b16 %v1446, %v1445
        %v1450 = vpack.c.b16 %v1448, %v1447
        %v1454 = vsel %vm1393, %v1399, 0
        %1456 = vmatpush.bf16.msra.mxu0 0
        %1457 = vmatpush.bf16.msra.mxu0 0
        %1458 = vmatpush.bf16.msra.mxu0 0
        %1459 = vmatpush.bf16.msra.mxu0 0
        %1460 = vmatpush.bf16.msra.mxu0 0
        %1461 = vmatpush.bf16.msra.mxu0 0
        %1462 = vmatpush.bf16.msra.mxu0 %v1450
        %1463 = vmatpush.bf16.msra.mxu0 %v1449
        %1464 = vmatmul.bf16.gmra.mxu0 %v1454
        %v1465 = vpop.f32.mrf.mxu0
        %v1466 = vadd.f32 %v1437, %v1465
        %v1467 = vpop.f32.mrf.mxu0
        %v1468 = vadd.f32 %v1439, %v1467
        %1469 = vdwg.mxu0
        %v1470 = vld [vmem:[#allocation2 + $0x2] sm:$0xff]
        %v1471 = vld [vmem:[#allocation2 + $0xa] sm:$0x3]
        %v1472 = vpack.c.bf16 %v1471, %v1470
        %s1473 = scalar_lea.vmem [#allocation9], 32
        %v1474 = vld [vmem:[%s1473] sm:$0xf]
        %v1475 = vld [vmem:[%s1473 + $0x4] sm:$0xf]
        %v1476 = vld [vmem:[%s1473 + $0x8] sm:$0xf]
        %v1477 = vld [vmem:[%s1473 + $0xc] sm:$0xf]
        %v1482 = vunpack.c.l.b16 %v1474
        %v1483 = vunpack.c.l.b16 %v1475
        %v1484 = vunpack.c.l.b16 %v1476
        %v1485 = vunpack.c.l.b16 %v1477
        %v1486 = vpack.c.b16 %v1483, %v1482
        %v1487 = vpack.c.b16 %v1485, %v1484
        %v1491 = vsel %vm1393, %v1472, 0
        %1493 = vmatpush.bf16.msra.mxu0 0
        %1494 = vmatpush.bf16.msra.mxu0 0
        %1495 = vmatpush.bf16.msra.mxu0 0
        %1496 = vmatpush.bf16.msra.mxu0 0
        %1497 = vmatpush.bf16.msra.mxu0 0
        %1498 = vmatpush.bf16.msra.mxu0 0
        %1499 = vmatpush.bf16.msra.mxu0 %v1487
        %1500 = vmatpush.bf16.msra.mxu0 %v1486
        %1501 = vmatmul.bf16.gmra.mxu0 %v1491
        %v1502 = vpop.f32.mrf.mxu0
        %v1503 = vadd.f32 0.0, %v1502
        %v1504 = vpop.f32.mrf.mxu0
        %v1505 = vadd.f32 0.0, %v1504
        %1506 = vdwg.mxu0
        %v1507 = vadd.f32 %v1466, %v1503
        %v1508 = vadd.f32 %v1468, %v1505
        %v1509 = vld [vmem:[#allocation10] sm:$0x1]
        %v1511 = vperm.slane %v1509, 0
        %v1513 = vmul.f32 %v1507, %v1511
        %v1514 = vmul.f32 %v1508, %v1511
        %v1515 = vld [vmem:[#allocation12] sm:$0x1]
        %v1517 = vperm.slane %v1515, 0
        %v1519 = vadd.f32 %v1513, %v1517
        %v1520 = vadd.f32 %v1514, %v1517
        %v1521 = vmax.f32 %v1519, 0.0
        %v1522 = vmax.f32 %v1520, 0.0
        %1523 = vst.msk [vmem:[#allocation2] sm:$0xff] %vm1393, %v1521
        %vm1524 = vcmask 254976
        %1525 = vst.msk [vmem:[#allocation2 + $0x8] sm:$0x3] %vm1524, %v1522
        %v1526 = vld [vmem:[#allocation2] sm:$0xff]
        %v1527 = vpack.c.bf16 %v1526, %v1526
        %v1528 = vld [vmem:[#allocation13] sm:$0xf]
        %v1529 = vld [vmem:[#allocation13 + $0x4] sm:$0xf]
        %v1530 = vld [vmem:[#allocation13 + $0x8] sm:$0xf]
        %v1531 = vld [vmem:[#allocation13 + $0xc] sm:$0xf]
        %v1532 = vld [vmem:[#allocation2 + $0x1] sm:$0xff]
        %v1533 = vpack.c.bf16 %v1532, %v1532
        %s1534 = scalar_lea.vmem [#allocation13], 16
        %v1535 = vld [vmem:[%s1534] sm:$0xf]
        %v1536 = vld [vmem:[%s1534 + $0x4] sm:$0xf]
        %v1537 = vld [vmem:[%s1534 + $0x8] sm:$0xf]
        %v1538 = vld [vmem:[%s1534 + $0xc] sm:$0xf]
        %v1543 = vunpack.c.l.b16 %v1535
        %v1544 = vunpack.c.l.b16 %v1536
        %v1545 = vunpack.c.l.b16 %v1537
        %v1546 = vunpack.c.l.b16 %v1538
        %v1547 = vpack.c.b16 %v1544, %v1543
        %v1548 = vpack.c.b16 %v1546, %v1545
        %v1552 = vsel %vm1393, %v1533, 0
        %1554 = vmatpush.bf16.msra.mxu0 0
        %1555 = vmatpush.bf16.msra.mxu0 0
        %1556 = vmatpush.bf16.msra.mxu0 0
        %1557 = vmatpush.bf16.msra.mxu0 0
        %1558 = vmatpush.bf16.msra.mxu0 0
        %1559 = vmatpush.bf16.msra.mxu0 0
        %1560 = vmatpush.bf16.msra.mxu0 %v1548
        %1561 = vmatpush.bf16.msra.mxu0 %v1547
        %1562 = vmatmul.bf16.gmra.mxu0 %v1552
        %v1563 = vpop.f32.mrf.mxu0
        %v1564 = vadd.f32 0.0, %v1563
        %v1565 = vpop.f32.mrf.mxu0
        %1566 = vdwg.mxu0
        %v1571 = vunpack.c.l.b16 %v1528
        %v1572 = vunpack.c.l.b16 %v1529
        %v1573 = vunpack.c.l.b16 %v1530
        %v1574 = vunpack.c.l.b16 %v1531
        %v1575 = vpack.c.b16 %v1572, %v1571
        %v1576 = vpack.c.b16 %v1574, %v1573
        %v1580 = vsel %vm1393, %v1527, 0
        %1582 = vmatpush.bf16.msra.mxu0 0
        %1583 = vmatpush.bf16.msra.mxu0 0
        %1584 = vmatpush.bf16.msra.mxu0 0
        %1585 = vmatpush.bf16.msra.mxu0 0
        %1586 = vmatpush.bf16.msra.mxu0 0
        %1587 = vmatpush.bf16.msra.mxu0 0
        %1588 = vmatpush.bf16.msra.mxu0 %v1576
        %1589 = vmatpush.bf16.msra.mxu0 %v1575
        %1590 = vmatmul.bf16.gmra.mxu0 %v1580
        %v1591 = vpop.f32.mrf.mxu0
        %v1592 = vadd.f32 %v1564, %v1591
        %v1593 = vpop.f32.mrf.mxu0
        %1594 = vdwg.mxu0
        %v1595 = vld [vmem:[#allocation2 + $0x2] sm:$0xff]
        %v1596 = vpack.c.bf16 %v1595, %v1595
        %s1597 = scalar_lea.vmem [#allocation13], 32
        %v1598 = vld [vmem:[%s1597] sm:$0xf]
        %v1599 = vld [vmem:[%s1597 + $0x4] sm:$0xf]
        %v1600 = vld [vmem:[%s1597 + $0x8] sm:$0xf]
        %v1601 = vld [vmem:[%s1597 + $0xc] sm:$0xf]
        %v1606 = vunpack.c.l.b16 %v1598
        %v1607 = vunpack.c.l.b16 %v1599
        %v1608 = vunpack.c.l.b16 %v1600
        %v1609 = vunpack.c.l.b16 %v1601
        %v1610 = vpack.c.b16 %v1607, %v1606
        %v1611 = vpack.c.b16 %v1609, %v1608
        %v1615 = vsel %vm1393, %v1596, 0
        %1617 = vmatpush.bf16.msra.mxu0 0
        %1618 = vmatpush.bf16.msra.mxu0 0
        %1619 = vmatpush.bf16.msra.mxu0 0
        %1620 = vmatpush.bf16.msra.mxu0 0
        %1621 = vmatpush.bf16.msra.mxu0 0
        %1622 = vmatpush.bf16.msra.mxu0 0
        %1623 = vmatpush.bf16.msra.mxu0 %v1611
        %1624 = vmatpush.bf16.msra.mxu0 %v1610
        %1625 = vmatmul.bf16.gmra.mxu0 %v1615
        %v1626 = vpop.f32.mrf.mxu0
        %v1627 = vadd.f32 0.0, %v1626
        %v1628 = vpop.f32.mrf.mxu0
        %1629 = vdwg.mxu0
        %v1630 = vadd.f32 %v1592, %v1627
        %v1631 = vld [vmem:[#allocation15] sm:$0x1]
        %v1633 = vperm.slane %v1631, 0
        %v1635 = vmul.f32 %v1630, %v1633
        %v1636 = vld [vmem:[#allocation16] sm:$0x1]
        %v1638 = vperm.slane %v1636, 0
        %v1640 = vadd.f32 %v1635, %v1638
        %v1641 = vmax.f32 %v1640, 0.0
        %1642 = vst.msk [vmem:[#allocation2] sm:$0xff] %vm1393, %v1641
        %v1643 = vld [vmem:[#allocation2] sm:$0xff]
        %v1644 = vpack.c.bf16 %v1643, %v1643
        %v1645 = vld [vmem:[%s25] sm:$0xf]
        %v1646 = vld [vmem:[%s25 + $0x4] sm:$0xf]
        %v1647 = vld [vmem:[%s25 + $0x8] sm:$0xf]
        %v1648 = vld [vmem:[%s25 + $0xc] sm:$0xf]
        %v1653 = vunpack.c.l.b16 %v1645
        %v1654 = vunpack.c.l.b16 %v1646
        %v1655 = vunpack.c.l.b16 %v1647
        %v1656 = vunpack.c.l.b16 %v1648
        %v1657 = vpack.c.b16 %v1654, %v1653
        %v1658 = vpack.c.b16 %v1656, %v1655
        %v1662 = vsel %vm1393, %v1644, 0
        %1664 = vmatpush.bf16.msra.mxu0 0
        %1665 = vmatpush.bf16.msra.mxu0 0
        %1666 = vmatpush.bf16.msra.mxu0 0
        %1667 = vmatpush.bf16.msra.mxu0 0
        %1668 = vmatpush.bf16.msra.mxu0 0
        %1669 = vmatpush.bf16.msra.mxu0 0
        %1670 = vmatpush.bf16.msra.mxu0 %v1658
        %1671 = vmatpush.bf16.msra.mxu0 %v1657
        %1672 = vmatmul.bf16.gmra.mxu0 %v1662
        %v1673 = vpop.f32.mrf.mxu0
        %v1674 = vadd.f32 0.0, %v1673
        %v1675 = vpop.f32.mrf.mxu0
        %1676 = vdwg.mxu0
        %v1677 = vld [vmem:[#allocation18] sm:$0x1]
        %v1679 = vperm.slane %v1677, 0
        %v1681 = vmul.f32 %v1674, %v1679
        %v1682 = vld [vmem:[#allocation19] sm:$0x1]
        %v1684 = vperm.slane %v1682, 0
        %v1686 = vadd.f32 %v1681, %v1684
        %v1687 = vmax.f32 %v1686, 0.0
        %1688 = vst.msk [vmem:[#allocation2] sm:$0xff] %vm1393, %v1687
        %v1689 = vld [vmem:[#allocation2] sm:$0xff]
        %v1690 = vpack.c.bf16 %v1689, %v1689
        %v1691 = vld [vmem:[%s31] sm:$0xf]
        %v1692 = vld [vmem:[%s31 + $0x4] sm:$0xf]
        %v1693 = vld [vmem:[%s31 + $0x8] sm:$0xf]
        %v1694 = vld [vmem:[%s31 + $0xc] sm:$0xf]
        %v1699 = vunpack.c.l.b16 %v1691
        %v1700 = vunpack.c.l.b16 %v1692
        %v1701 = vunpack.c.l.b16 %v1693
        %v1702 = vunpack.c.l.b16 %v1694
        %v1703 = vpack.c.b16 %v1700, %v1699
        %v1704 = vpack.c.b16 %v1702, %v1701
        %v1708 = vsel %vm1393, %v1690, 0
        %1710 = vmatpush.bf16.msra.mxu0 0
        %1711 = vmatpush.bf16.msra.mxu0 0
        %1712 = vmatpush.bf16.msra.mxu0 0
        %1713 = vmatpush.bf16.msra.mxu0 0
        %1714 = vmatpush.bf16.msra.mxu0 0
        %1715 = vmatpush.bf16.msra.mxu0 0
        %1716 = vmatpush.bf16.msra.mxu0 %v1704
        %1717 = vmatpush.bf16.msra.mxu0 %v1703
        %1718 = vmatmul.bf16.gmra.mxu0 %v1708
        %v1719 = vpop.f32.mrf.mxu0
        %v1720 = vadd.f32 0.0, %v1719
        %v1721 = vpop.f32.mrf.mxu0
        %1722 = vdwg.mxu0
        %v1723 = vld [vmem:[%s33] sm:$0x1]
        %v1725 = vperm.slane %v1723, 0
        %v1727 = vmul.f32 %v1720, %v1725
        %v1728 = vld [vmem:[%s35] sm:$0x1]
        %v1730 = vperm.slane %v1728, 0
        %v1732 = vadd.f32 %v1727, %v1730
        %v1733 = vmax.f32 %v1732, 0.0
        %v1734 = vld [vmem:[#allocation21] sm:$0x1]
        %v1736 = vperm.slane %v1734, 0
        %v1738 = vmul.f32 %v1733, %v1736
        %v1739 = vsel %vm1393, %v1738, 0.0
        %1740 = vadd.xlane.f32.xlu0 %v1739
        %v1741 = vpop.xlane.xlu0 %1740
        %v1742 = vld [vmem:[#allocation3] sm:$0x1]
        %v1744 = vperm.slane %v1742, 0
        %v1746 = vadd.f32 %v1741, %v1744
        %vm1747 = vcmask 7168
        %v1748 = vsel %vm1747, %v1746, -inf
        %v1749 = vrot.slane %v1748, 4
        %v1750 = vmax.f32 %v1748, %v1749
        %v1751 = vrot.slane %v1750, 2
        %v1752 = vmax.f32 %v1750, %v1751
        %v1753 = vrot.slane %v1752, 1
        %v1754 = vmax.f32 %v1752, %v1753
        %v1755 = vsub.f32 %v1746, %v1754
        %v1756 = vmul.f32 %v1755, 1.442695
        %v1757 = vpow.pop %v1756
        %v1758 = vsel %vm1747, %v1757, 0.0
        %v1759 = vrot.slane %v1758, 4
        %v1760 = vadd.f32 %v1758, %v1759
        %v1761 = vrot.slane %v1760, 2
        %v1762 = vadd.f32 %v1760, %v1761
        %v1763 = vrot.slane %v1762, 1
        %v1764 = vadd.f32 %v1762, %v1763
        %v1765 = vrcp.pop %v1764
        %v1766 = vmul.f32 %v1764, %v1765
        %v1767 = vsub.f32 1.0, %v1766
        %v1768 = vmul.f32 %v1765, %v1767
        %v1769 = vadd.f32 %v1765, %v1768
        %vm1770 = vweird.f32 %v1764
        %vm1771 = vweird.f32 %v1765
        %vm1772 = vmor %vm1770, %vm1771
        %v1773 = vsel %vm1772, %v1765, %v1769
        %v1774 = vand.u32 2147483647, %v1764
        %vm1775 = vcmp.eq.f32.partialorder %v1774, 8.507059e+37
        %v1776 = vand.u32 %v1764, 2147483648
        %v1777 = vor.u32 1.1754944e-38, %v1776
        %v1778 = vsel %vm1775, %v1777, %v1773
        %v1779 = vmul.f32 %v1757, %v1778
        %1781 = vset.pattern.permute.xlu0 0
        %1782 = vperm.xlu0 %1781, %v1779
        %v1783 = vpop.permute.xlu0 %1782
        %v1785 = vmul.f32 %v1783, %v1733
        %v1786 = vsel %vm1393, %v1785, 0.0
        %v1787 = vrot.slane %v1786, 4
        %v1788 = vadd.f32 %v1786, %v1787
        %v1789 = vrot.slane %v1788, 2
        %v1790 = vadd.f32 %v1788, %v1789
        %v1791 = vrot.slane %v1790, 1
        %v1792 = vadd.f32 %v1790, %v1791
        %v1793 = vsub.f32 %v1733, %v1792
        %v1794 = vmul.f32 %v1793, %v1793
        %v1795 = vmul.f32 %v1783, %v1794
        %v1796 = vsel %vm1393, %v1795, 0.0
        %v1797 = vrot.slane %v1796, 4
        %v1798 = vadd.f32 %v1796, %v1797
        %v1799 = vrot.slane %v1798, 2
        %v1800 = vadd.f32 %v1798, %v1799
        %v1801 = vrot.slane %v1800, 1
        %v1802 = vadd.f32 %v1800, %v1801
        %v1803 = vadd.f32 %v1802, 1e-06
        %v1804 = vrsqrt.pop %v1803
        %v1805 = vmul.f32 %v1804, %v1803
        %v1806 = vmul.f32 %v1805, %v1804
        %v1807 = vmul.f32 0.5, %v1806
        %v1808 = vsub.f32 1.5, %v1807
        %v1809 = vmul.f32 %v1804, %v1808
        %v1810 = vmul.f32 %v1803, %v1809
        %vm1811 = vcmp.eq.f32.partialorder %v1803, inf
        %v1812 = vsel %vm1811, %v1803, %v1810
        %vm1813 = vcmp.eq.f32.partialorder %v1803, 0.0
        %v1814 = vand.u32 %v1803, 2147483648
        %v1815 = vsel %vm1813, %v1814, %v1812
        %v1816 = vpack.c.bf16 %v1792, %v1792
        %v1817 = vld [vmem:[#allocation22] sm:$0xf]
        %v1818 = vld [vmem:[#allocation22 + $0x4] sm:$0xf]
        %v1819 = vld [vmem:[#allocation22 + $0x8] sm:$0xf]
        %v1820 = vld [vmem:[#allocation22 + $0xc] sm:$0xf]
        %v1821 = vpack.c.bf16 %v1815, %v1815
        %v1822 = vld [vmem:[#allocation24] sm:$0xf]
        %v1823 = vld [vmem:[#allocation24 + $0x4] sm:$0xf]
        %v1824 = vld [vmem:[#allocation24 + $0x8] sm:$0xf]
        %v1825 = vld [vmem:[#allocation24 + $0xc] sm:$0xf]
        %v1830 = vunpack.c.l.b16 %v1822
        %v1831 = vunpack.c.l.b16 %v1823
        %v1832 = vunpack.c.l.b16 %v1824
        %v1833 = vunpack.c.l.b16 %v1825
        %v1834 = vpack.c.b16 %v1831, %v1830
        %v1835 = vpack.c.b16 %v1833, %v1832
        %v1839 = vsel %vm1393, %v1821, 0
        %1841 = vmatpush.bf16.msra.mxu0 0
        %1842 = vmatpush.bf16.msra.mxu0 0
        %1843 = vmatpush.bf16.msra.mxu0 0
        %1844 = vmatpush.bf16.msra.mxu0 0
        %1845 = vmatpush.bf16.msra.mxu0 0
        %1846 = vmatpush.bf16.msra.mxu0 0
        %1847 = vmatpush.bf16.msra.mxu0 %v1835
        %1848 = vmatpush.bf16.msra.mxu0 %v1834
        %1849 = vmatmul.bf16.gmra.mxu0 %v1839
        %v1850 = vpop.f32.mrf.mxu0
        %v1851 = vadd.f32 0.0, %v1850
        %v1852 = vpop.f32.mrf.mxu0
        %1853 = vdwg.mxu0
        %v1858 = vunpack.c.l.b16 %v1817
        %v1859 = vunpack.c.l.b16 %v1818
        %v1860 = vunpack.c.l.b16 %v1819
        %v1861 = vunpack.c.l.b16 %v1820
        %v1862 = vpack.c.b16 %v1859, %v1858
        %v1863 = vpack.c.b16 %v1861, %v1860
        %v1867 = vsel %vm1393, %v1816, 0
        %1869 = vmatpush.bf16.msra.mxu0 0
        %1870 = vmatpush.bf16.msra.mxu0 0
        %1871 = vmatpush.bf16.msra.mxu0 0
        %1872 = vmatpush.bf16.msra.mxu0 0
        %1873 = vmatpush.bf16.msra.mxu0 0
        %1874 = vmatpush.bf16.msra.mxu0 0
        %1875 = vmatpush.bf16.msra.mxu0 %v1863
        %1876 = vmatpush.bf16.msra.mxu0 %v1862
        %1877 = vmatmul.bf16.gmra.mxu0 %v1867
        %v1878 = vpop.f32.mrf.mxu0
        %v1879 = vadd.f32 %v1851, %v1878
        %v1880 = vpop.f32.mrf.mxu0
        %1881 = vdwg.mxu0
        %v1882 = vld [vmem:[%s45] sm:$0x1]
        %v1883 = vmul.f32 %v1879, %v1882
        %v1884 = vld [vmem:[%s47] sm:$0x1]
        %v1885 = vadd.f32 %v1883, %v1884
        %v1886 = vmax.f32 %v1885, 0.0
        %v1887 = vpack.c.bf16 %v1886, %v1886
        %v1888 = vld [vmem:[#allocation25] sm:$0xf]
        %v1889 = vld [vmem:[#allocation25 + $0x4] sm:$0xf]
        %v1890 = vld [vmem:[#allocation25 + $0x8] sm:$0xf]
        %v1891 = vld [vmem:[#allocation25 + $0xc] sm:$0xf]
        %v1896 = vunpack.c.l.b16 %v1888
        %v1897 = vunpack.c.l.b16 %v1889
        %v1898 = vunpack.c.l.b16 %v1890
        %v1899 = vunpack.c.l.b16 %v1891
        %v1900 = vpack.c.b16 %v1897, %v1896
        %v1901 = vpack.c.b16 %v1899, %v1898
        %v1905 = vsel %vm1393, %v1887, 0
        %1907 = vmatpush.bf16.msra.mxu0 0
        %1908 = vmatpush.bf16.msra.mxu0 0
        %1909 = vmatpush.bf16.msra.mxu0 0
        %1910 = vmatpush.bf16.msra.mxu0 0
        %1911 = vmatpush.bf16.msra.mxu0 0
        %1912 = vmatpush.bf16.msra.mxu0 0
        %1913 = vmatpush.bf16.msra.mxu0 %v1901
        %1914 = vmatpush.bf16.msra.mxu0 %v1900
        %1915 = vmatmul.bf16.gmra.mxu0 %v1905
        %v1916 = vpop.f32.mrf.mxu0
        %v1917 = vadd.f32 0.0, %v1916
        %v1918 = vpop.f32.mrf.mxu0
        %1919 = vdwg.mxu0
        %v1920 = vld [vmem:[#allocation27] sm:$0x1]
        %v1921 = vmul.f32 %v1917, %v1920
        %v1922 = vld [vmem:[#allocation28] sm:$0x1]
        %v1923 = vadd.f32 %v1921, %v1922
        %v1924 = vmax.f32 %v1923, 0.0
        %v1925 = vpack.c.bf16 %v1924, %v1924
        %v1926 = vld [vmem:[%s55] sm:$0xf]
        %v1927 = vld [vmem:[%s55 + $0x4] sm:$0xf]
        %v1928 = vld [vmem:[%s55 + $0x8] sm:$0xf]
        %v1929 = vld [vmem:[%s55 + $0xc] sm:$0xf]
        %v1934 = vunpack.c.l.b16 %v1926
        %v1935 = vunpack.c.l.b16 %v1927
        %v1936 = vunpack.c.l.b16 %v1928
        %v1937 = vunpack.c.l.b16 %v1929
        %v1938 = vpack.c.b16 %v1935, %v1934
        %v1939 = vpack.c.b16 %v1937, %v1936
        %v1943 = vsel %vm1393, %v1925, 0
        %1945 = vmatpush.bf16.msra.mxu0 0
        %1946 = vmatpush.bf16.msra.mxu0 0
        %1947 = vmatpush.bf16.msra.mxu0 0
        %1948 = vmatpush.bf16.msra.mxu0 0
        %1949 = vmatpush.bf16.msra.mxu0 0
        %1950 = vmatpush.bf16.msra.mxu0 0
        %1951 = vmatpush.bf16.msra.mxu0 %v1939
        %1952 = vmatpush.bf16.msra.mxu0 %v1938
        %1953 = vmatmul.bf16.gmra.mxu0 %v1943
        %v1954 = vpop.f32.mrf.mxu0
        %v1955 = vadd.f32 0.0, %v1954
        %v1956 = vpop.f32.mrf.mxu0
        %1957 = vdwg.mxu0
        %v1958 = vld [vmem:[#allocation30] sm:$0x1]
        %v1959 = vmul.f32 %v1955, %v1958
        %v1960 = vld [vmem:[#allocation31] sm:$0x1]
        %v1961 = vadd.f32 %v1959, %v1960
        %vm1962 = vcmask 57344
        %1963 = vst.msk [vmem:[%s1210] sm:$0x1] %vm1962, %v1961
        %s1964 = sand.u32 %s732, 1
        %s1965 = scalar_lea.sflag [#allocation6], %s1964
        %s1966 = sand.u32 %s732, 1
        %s1967 = scalar_lea.vmem [#allocation33], %s1966
        // Predicated region
        $region213: #{tdnn_forward.1} parent=139 // pred_check
          %p1968 = pneg %p742
        $region214: #{tdnn_forward.1} parent=139 // pred_check_branch
          %1970 = sbr.rel (%p1968) target = $region216
        $region215: #{tdnn_forward.1} parent=139 // pred_region
          %1972 = vsyncadd %s1965, 0
          %s1973 = scalar_lea.hbm %s61, %s89
          %s1975 = sshll.u32 %s1967, 4
          %s1976 = int_to_ptr.vmem [resolvable:$true] %s1975
          %s1977 = sshll.u32 %s1973, 4
          %s1978 = int_to_ptr.hbm [resolvable:$true] %s1977
          %1980 = dma.vmem_to_hbm [thread:$0]  %s1976, 16, %s1978, %s1965
        $region216: #{tdnn_forward.1} parent=139 // pred_fallthru
          _
      $region140: #{tdnn_forward.1} parent=5 // pred_fallthru
        _
      %p1981 = scmp.le.s32.totalorder 2, %s84
      // Predicated region
      $region217: #{tdnn_forward.1} parent=5 // pred_check
        %p1982 = pneg %p1981
      $region218: #{tdnn_forward.1} parent=5 // pred_check_branch
        %1984 = sbr.rel (%p1982) target = $region220
      $region219: #{tdnn_forward.1} parent=5 // pred_region
        %s1985 = ssub.s32 %s84, 2
        // Predicated region
        $region221: #{tdnn_forward.1} parent=219 // pred_check
          %p1986 = pneg %p748
        $region222: #{tdnn_forward.1} parent=219 // pred_check_branch
          %1988 = sbr.rel (%p1986) target = $region224
        $region223: #{tdnn_forward.1} parent=219 // pred_region
          %s1989 = sand.u32 %s733, 1
          %s1990 = scalar_lea.sflag [#allocation6], %s1989
          %s1991 = sand.u32 %s733, 1
          %s1992 = scalar_lea.vmem [#allocation33], %s1991
          %1994 = dma.done %s1990, 16
        $region224: #{tdnn_forward.1} parent=219 // pred_fallthru
          _
      $region220: #{tdnn_forward.1} parent=5 // pred_fallthru
        _
    $region6: #{tdnn_forward.1} parent=1 // loop_footer
      %s88 = sadd.s32 1, %s84
    $region7: #{tdnn_forward.1} parent=1 // loop_footer_branch
      %83 = sbr.rel target = $region3
    $region8: #{tdnn_forward.1} parent=1 // loop_exit
      _
    %1995 = vsyncpa [#allocation5], 1
    %s1996 = scalar_lea.sflag [#allocation5], 1
    %1997 = vsyncpa %s1996, 1
    %1998 = vsyncpa [#allocation8], 1
    %1999 = vsyncpa [#allocation11], 1
    %2000 = vsyncpa [#allocation14], 1
    %2001 = vsyncpa [#allocation17], 1
    %2002 = vsyncpa [#allocation20], 1
    %2003 = vsyncpa [#allocation23], 1
    %2004 = vsyncpa [#allocation26], 1
    %2005 = vsyncpa [#allocation29], 1
    %2006 = vsyncpa [#allocation32], 1
    %2007 = vsyncpa [#allocation6], 1
    %s2008 = scalar_lea.sflag [#allocation6], 1
    %2009 = vsyncpa %s2008, 1

</llo_original>
